<compile_context>
chip_gen: v7x
topology: tpu7x:2x2x1
jax: 0.10.0
libtpu: 0.0.40
codegen_flags: <defaults>
</compile_context>

<pallas_src>
import functools

import jax
import jax.numpy as jnp
from jax.experimental import pallas as pl
from jax.experimental.pallas import tpu as pltpu


def _round_up(n, m):
    return ((n + m - 1) // m) * m


def _client_max_kernel(x_ref, w1_ref, b1_ref, wih_ref, bih_ref,
                       whh_ref, bhh_ref, w2_ref, b2_ref, w3_ref, b3_ref,
                       enc_ref, out_ref, gx_ref,
                       *, seq_len, n_pad, batch_pad, n_clients):
    H = whh_ref.shape[0]
    f32, bf16 = jnp.float32, jnp.bfloat16

    # ---- Hoisted time-invariant input path: two big batched matmuls over all
    #      S*Np rows (BatchNorm folded into w1/b1; dropout identity in eval).
    x = x_ref[...]                                                   # (S*Np, F) bf16
    a = jnp.dot(x, w1_ref[...], preferred_element_type=f32) + b1_ref[...]
    a = jnp.maximum(a, 0.0)                                          # (S*Np, H) f32
    g = (jnp.dot(a.astype(bf16), wih_ref[...], preferred_element_type=f32)
         + bih_ref[...])                                             # (S*Np, 3H) f32
    # Store gx (input-side gate pre-activation, bias included) in bf16.  Static
    # per-step stores into a (S, Np, 3H) scratch avoid packed-dtype reshapes and
    # keep every store sublane/lane aligned.
    for t in range(seq_len):
        gx_ref[t] = g[t * n_pad:(t + 1) * n_pad, :].astype(bf16)

    # ---- Serial GRU recurrence: one fused (Np,H)@(H,3H) matmul + f32 gate math
    #      per step, fully unrolled (S small & static).
    def gru_step(t, h):
        gi = gx_ref[t].astype(f32)                                   # (Np, 3H)
        gh = (jnp.dot(h.astype(bf16), whh_ref[...], preferred_element_type=f32)
              + bhh_ref[...])
        r = jax.nn.sigmoid(gi[:, 0:H] + gh[:, 0:H])
        z = jax.nn.sigmoid(gi[:, H:2 * H] + gh[:, H:2 * H])
        n = jnp.tanh(gi[:, 2 * H:3 * H] + r * gh[:, 2 * H:3 * H])
        return (1.0 - z) * n + z * h

    h0 = jnp.zeros((n_pad, H), f32)
    h = jax.lax.fori_loop(0, seq_len, gru_step, h0, unroll=True)

    # ---- linear2 -> enc.  w2/b2 are lane-padded to Hp (multiple of 128) so the
    #      store is lane-dense; padded columns are exactly zero.
    enc = (jnp.dot(h.astype(bf16), w2_ref[...], preferred_element_type=f32)
           + b2_ref[...])                                            # (Np, Hp)
    enc_ref[...] = enc

    # ---- per-batch max over clients.  Rows are client-major (row = c*Bp + b)
    #      with Bp a multiple of 8 -> whole-sublane-block VPU maximums.
    m = enc[0:batch_pad, :]
    for c in range(1, n_clients):
        m = jnp.maximum(m, enc[c * batch_pad:(c + 1) * batch_pad, :])

    # L2 normalize via EUP rsqrt; max(sumsq, eps^2) == F.normalize's max(||m||, eps).
    sumsq = jnp.sum(m * m, axis=1, keepdims=True)
    m = m * jax.lax.rsqrt(jnp.maximum(sumsq, 1e-24))

    # Classification head against lane-padded (Hp, Ap) w3 -> lane-dense store.
    out_ref[...] = (jnp.dot(m.astype(bf16), w3_ref[...], preferred_element_type=f32)
                    + b3_ref[...])


def _prep_kernel_params(params, lane=128):
    """Fold BN into linear1, lane-fuse the GRU gates into (H, 3H)/(1, 3H),
    zero-pad the output-side weights to lane-dense widths, cast matmul operands
    to bf16 (biases stay f32)."""
    f32, bf16 = jnp.float32, jnp.bfloat16
    Fdim, H = params["w1"].shape
    A = params["w3"].shape[1]
    Hp = _round_up(H, lane)
    Ap = _round_up(A, lane)

    w1f = params["bn_scale"].reshape(Fdim, 1) * params["w1"]                 # (F, H)
    b1f = params["b1"] + params["bn_shift"].reshape(1, Fdim) @ params["w1"]  # (1, H)
    wih = jnp.concatenate([params["wih"][k] for k in range(3)], axis=1)      # (H, 3H)
    whh = jnp.concatenate([params["whh"][k] for k in range(3)], axis=1)      # (H, 3H)
    bih = jnp.concatenate([params["bih"][k] for k in range(3)], axis=1)      # (1, 3H)
    bhh = jnp.concatenate([params["bhh"][k] for k in range(3)], axis=1)      # (1, 3H)

    w2 = jnp.pad(params["w2"], ((0, 0), (0, Hp - H)))                        # (H, Hp)
    b2 = jnp.pad(params["b2"], ((0, 0), (0, Hp - H)))                        # (1, Hp)
    w3 = jnp.pad(params["w3"], ((0, Hp - H), (0, Ap - A)))                   # (Hp, Ap)
    b3 = jnp.pad(params["b3"], ((0, 0), (0, Ap - A)))                        # (1, Ap)

    return dict(
        w1=w1f.astype(bf16), b1=b1f.astype(f32),
        wih=wih.astype(bf16), bih=bih.astype(f32),
        whh=whh.astype(bf16), bhh=bhh.astype(f32),
        w2=w2.astype(bf16), b2=b2.astype(f32),
        w3=w3.astype(bf16), b3=b3.astype(f32),
    )


@functools.partial(jax.jit, static_argnames=("n_activities",))
def client_max_forward(inp, params, n_activities):
    """inp: (B, n_clients, n_feature, seq) float32, PyTorch layout."""
    B, NC, Fdim, S = inp.shape
    H = params["w1"].shape[1]
    Bp = _round_up(B, 8)              # sublane-aligned per-client row block
    Np = NC * Bp                      # rows per time step (multiple of 8)
    Hp = _round_up(H, 128)            # lane-dense enc width
    Ap = _round_up(n_activities, 128)  # lane-dense logits width

    kp = _prep_kernel_params(params)

    # (B,NC,F,S) -> time-major / client-major rows, each client's batch block
    # padded to Bp sublanes: row = t*Np + c*Bp + b.
    # TODO(synk): at production sizes this XLA transpose+pad is an extra HBM
    # round-trip the size of the kernel's input DMA; produce x in this layout
    # upstream (or fuse into the producing op) to avoid it.
    x = jnp.swapaxes(inp, 2, 3).transpose(2, 1, 0, 3)            # (S, NC, B, F)
    x = jnp.pad(x, ((0, 0), (0, 0), (0, Bp - B), (0, 0)))        # (S, NC, Bp, F)
    x = x.reshape(S * Np, Fdim).astype(jnp.bfloat16)

    kernel = functools.partial(_client_max_kernel, seq_len=S, n_pad=Np,
                               batch_pad=Bp, n_clients=NC)
    vmem = pl.BlockSpec(memory_space=pltpu.MemorySpace.VMEM)
    args = (x, kp["w1"], kp["b1"], kp["wih"], kp["bih"], kp["whh"], kp["bhh"],
            kp["w2"], kp["b2"], kp["w3"], kp["b3"])

    enc_pad, logits_pad = pl.pallas_call(
        kernel,
        out_shape=(jax.ShapeDtypeStruct((Np, Hp), jnp.float32),
                   jax.ShapeDtypeStruct((Bp, Ap), jnp.float32)),
        in_specs=[vmem] * len(args),
        out_specs=(vmem, vmem),
        scratch_shapes=[pltpu.VMEM((S, Np, 3 * H), jnp.bfloat16)],
    )(*args)

    # Rows are client-major (c*Bp + b); drop sublane pad rows and lane pad cols.
    enc = enc_pad[:, :H].reshape(NC, Bp, H)[:, :B].transpose(1, 0, 2)  # (B, NC, H)
    logits = logits_pad[:B, :n_activities]                             # (B, A)
    return logits, enc


def init_params(key, n_feature, n_hidden, n_activities):
    ks = jax.random.split(key, 16)

    def u(k, shape, scale):
        return jax.random.uniform(k, shape, jnp.float32, -scale, scale)

    # BatchNorm1d params + running stats (eval mode), pre-reduced to scale/shift.
    gamma = 1.0 + 0.1 * jax.random.normal(ks[0], (n_feature,), jnp.float32)
    beta = 0.1 * jax.random.normal(ks[1], (n_feature,), jnp.float32)
    rmean = 0.05 * jax.random.normal(ks[2], (n_feature,), jnp.float32)
    rvar = jnp.abs(1.0 + 0.1 * jax.random.normal(ks[3], (n_feature,), jnp.float32))
    eps = 1e-5
    scale = gamma / jnp.sqrt(rvar + eps)
    shift = beta - rmean * scale

    s1 = 1.0 / jnp.sqrt(jnp.float32(n_feature))
    sH = 1.0 / jnp.sqrt(jnp.float32(n_hidden))
    return dict(
        bn_scale=scale.reshape(1, n_feature),
        bn_shift=shift.reshape(1, n_feature),
        w1=u(ks[4], (n_feature, n_hidden), s1),
        b1=u(ks[5], (1, n_hidden), s1),
        wih=u(ks[6], (3, n_hidden, n_hidden), sH),
        bih=u(ks[7], (3, 1, n_hidden), sH),
        whh=u(ks[8], (3, n_hidden, n_hidden), sH),
        bhh=u(ks[9], (3, 1, n_hidden), sH),
        w2=u(ks[10], (n_hidden, n_hidden), sH),
        b2=u(ks[11], (1, n_hidden), sH),
        w3=u(ks[12], (n_hidden, n_activities), sH),
        b3=u(ks[13], (1, n_activities), sH),
    )


def reference_f32(inp, params):
    """Naive pure-JAX f32 re-implementation of the PyTorch forward (eval mode)."""
    B, NC, Fdim, S = inp.shape
    H = params["w1"].shape[1]
    x = jnp.swapaxes(inp, 2, 3).reshape(B * NC, S, Fdim)
    x = x * params["bn_scale"] + params["bn_shift"]
    x = jax.nn.relu(x @ params["w1"] + params["b1"][0])
    h = jnp.zeros((B * NC, H), jnp.float32)
    for t in range(S):
        a = x[:, t, :]
        r = jax.nn.sigmoid(a @ params["wih"][0] + params["bih"][0]
                           + h @ params["whh"][0] + params["bhh"][0])
        z = jax.nn.sigmoid(a @ params["wih"][1] + params["bih"][1]
                           + h @ params["whh"][1] + params["bhh"][1])
        n = jnp.tanh(a @ params["wih"][2] + params["bih"][2]
                     + r * (h @ params["whh"][2] + params["bhh"][2]))
        h = (1.0 - z) * n + z * h
    enc = (h @ params["w2"] + params["b2"]).reshape(B, NC, H)
    m = jnp.max(enc, axis=1)
    m = m / jnp.maximum(jnp.linalg.norm(m, axis=1, keepdims=True), 1e-12)
    logits = m @ params["w3"] + params["b3"]
    return logits, enc


def reference_matched(inp, params):
    """Pure-JAX mirror of the kernel math (BN folded, lane-fused gates, bf16 MXU
    operands + bf16 gx with f32 accumulation, lane-padded head) -- tight check."""
    B, NC, Fdim, S = inp.shape
    H = params["w1"].shape[1]
    A = params["w3"].shape[1]
    N = B * NC
    kp = _prep_kernel_params(params)
    bf16 = jnp.bfloat16

    def mm(a, b):
        return jnp.dot(a.astype(bf16), b, preferred_element_type=jnp.float32)

    # same client-major, time-major row layout as the kernel (minus sublane pad)
    x = jnp.swapaxes(inp, 2, 3).transpose(2, 1, 0, 3).reshape(S * N, Fdim)
    a = jnp.maximum(mm(x, kp["w1"]) + kp["b1"], 0.0)
    gx = (mm(a, kp["wih"]) + kp["bih"]).astype(bf16)           # (S*N, 3H) bf16
    h = jnp.zeros((N, H), jnp.float32)
    for t in range(S):
        gi = gx[t * N:(t + 1) * N].astype(jnp.float32)
        gh = mm(h, kp["whh"]) + kp["bhh"]
        r = jax.nn.sigmoid(gi[:, 0:H] + gh[:, 0:H])
        z = jax.nn.sigmoid(gi[:, H:2 * H] + gh[:, H:2 * H])
        n = jnp.tanh(gi[:, 2 * H:] + r * gh[:, 2 * H:])
        h = (1.0 - z) * n + z * h
    enc = mm(h, kp["w2"]) + kp["b2"]                           # (N, Hp), client-major
    m = jnp.max(enc.reshape(NC, B, -1), axis=0)
    m = m * jax.lax.rsqrt(jnp.maximum(jnp.sum(m * m, axis=1, keepdims=True), 1e-24))
    logits = mm(m, kp["w3"]) + kp["b3"]
    enc_out = enc[:, :H].reshape(NC, B, H).transpose(1, 0, 2)
    return logits[:, :A], enc_out


if __name__ == "__main__":
    # Small shapes consistent with the module: (batch, n_clients, n_feature, seq)
    B, NC, Fdim, S, H, A = 2, 3, 32, 8, 32, 6
    key = jax.random.PRNGKey(0)
    k_inp, k_par = jax.random.split(key)
    inp = jax.random.normal(k_inp, (B, NC, Fdim, S), jnp.float32)
    params = init_params(k_par, n_feature=Fdim, n_hidden=H, n_activities=A)

    logits, enc = client_max_forward(inp, params, n_activities=A)
    jax.block_until_ready((logits, enc))
    assert logits.shape == (B, A) and enc.shape == (B, NC, H)

    # Tight check against a bf16-matched pure-JAX mirror of the kernel math.
    m_logits, m_enc = reference_matched(inp, params)
    assert jnp.allclose(logits, m_logits, atol=2e-3, rtol=2e-3)
    assert jnp.allclose(enc, m_enc, atol=2e-3, rtol=2e-3)

    # Semantic check against the f32 PyTorch-style reference; tolerance is loose
    # because the kernel uses bf16 MXU operands and a bf16 gx scratch (f32 accum).
    r_logits, r_enc = reference_f32(inp, params)
    assert jnp.allclose(logits, r_logits, atol=6e-2, rtol=6e-2)
    assert jnp.allclose(enc, r_enc, atol=6e-2, rtol=6e-2)
    print("KERNEL_OK")
</pallas_src>

<mosaic_0001>
module attributes {stable_mosaic.version = 11 : i64} {
  func.func @_client_max_kernel(%arg0: memref<192x32xbf16, #tpu.memory_space<vmem>>, %arg1: memref<32x32xbf16, #tpu.memory_space<vmem>>, %arg2: memref<1x32xf32, #tpu.memory_space<vmem>>, %arg3: memref<32x96xbf16, #tpu.memory_space<vmem>>, %arg4: memref<1x96xf32, #tpu.memory_space<vmem>>, %arg5: memref<32x96xbf16, #tpu.memory_space<vmem>>, %arg6: memref<1x96xf32, #tpu.memory_space<vmem>>, %arg7: memref<32x128xbf16, #tpu.memory_space<vmem>>, %arg8: memref<1x128xf32, #tpu.memory_space<vmem>>, %arg9: memref<128x128xbf16, #tpu.memory_space<vmem>>, %arg10: memref<1x128xf32, #tpu.memory_space<vmem>>, %arg11: memref<24x128xf32, #tpu.memory_space<vmem>>, %arg12: memref<8x128xf32, #tpu.memory_space<vmem>>, %arg13: memref<8x24x96xbf16, #tpu.memory_space<vmem>>) attributes {dimension_semantics = [], scalar_prefetch = 0 : i64, scratch_operands = 1 : i64, tpu.core_type = #tpu.core_type<tc>} {
    %c0 = arith.constant 0 : index
    %c0_0 = arith.constant 0 : index
    %0 = vector.load %arg0[%c0, %c0_0] : memref<192x32xbf16, #tpu.memory_space<vmem>>, vector<192x32xbf16>
    %c0_1 = arith.constant 0 : index
    %c0_2 = arith.constant 0 : index
    %1 = vector.load %arg1[%c0_1, %c0_2] : memref<32x32xbf16, #tpu.memory_space<vmem>>, vector<32x32xbf16>
    %cst = arith.constant dense<0.000000e+00> : vector<192x32xf32>
    %2 = tpu.matmul %0, %1, %cst {dimension_numbers = #tpu.dot_dimension_numbers<[1], [0], [0], [1], [0, 0, 1, 1], [], []>} : vector<192x32xbf16>, vector<32x32xbf16>, vector<192x32xf32> -> vector<192x32xf32>
    %c0_3 = arith.constant 0 : index
    %c0_4 = arith.constant 0 : index
    %3 = vector.load %arg2[%c0_3, %c0_4] : memref<1x32xf32, #tpu.memory_space<vmem>>, vector<1x32xf32>
    %4 = vector.broadcast %3 : vector<1x32xf32> to vector<192x32xf32>
    %5 = arith.addf %2, %4 : vector<192x32xf32>
    %cst_5 = arith.constant 0.000000e+00 : f32
    %6 = vector.broadcast %cst_5 : f32 to vector<192x32xf32>
    %7 = arith.maximumf %5, %6 : vector<192x32xf32>
    %8 = arith.truncf %7 : vector<192x32xf32> to vector<192x32xbf16>
    %c0_6 = arith.constant 0 : index
    %c0_7 = arith.constant 0 : index
    %9 = vector.load %arg3[%c0_6, %c0_7] : memref<32x96xbf16, #tpu.memory_space<vmem>>, vector<32x96xbf16>
    %cst_8 = arith.constant dense<0.000000e+00> : vector<192x96xf32>
    %10 = tpu.matmul %8, %9, %cst_8 {dimension_numbers = #tpu.dot_dimension_numbers<[1], [0], [0], [1], [0, 0, 1, 1], [], []>} : vector<192x32xbf16>, vector<32x96xbf16>, vector<192x96xf32> -> vector<192x96xf32>
    %c0_9 = arith.constant 0 : index
    %c0_10 = arith.constant 0 : index
    %11 = vector.load %arg4[%c0_9, %c0_10] : memref<1x96xf32, #tpu.memory_space<vmem>>, vector<1x96xf32>
    %12 = vector.broadcast %11 : vector<1x96xf32> to vector<192x96xf32>
    %13 = arith.addf %10, %12 : vector<192x96xf32>
    %14 = vector.extract_strided_slice %13 {offsets = [0, 0], sizes = [24, 96], strides = [1, 1]} : vector<192x96xf32> to vector<24x96xf32>
    %15 = arith.truncf %14 : vector<24x96xf32> to vector<24x96xbf16>
    %c0_11 = arith.constant 0 : index
    %c0_12 = arith.constant 0 : index
    %c0_13 = arith.constant 0 : index
    %16 = vector.load %arg13[%c0_11, %c0_12, %c0_13] : memref<8x24x96xbf16, #tpu.memory_space<vmem>>, vector<1x24x96xbf16>
    %17 = vector.shape_cast %16 : vector<1x24x96xbf16> to vector<24x96xbf16>
    %18 = vector.shape_cast %15 : vector<24x96xbf16> to vector<1x24x96xbf16>
    tpu.vector_store %arg13[%c0_11, %c0_12, %c0_13], %18 {strides = array<i32>} : memref<8x24x96xbf16, #tpu.memory_space<vmem>>, vector<1x24x96xbf16>,
    %19 = vector.extract_strided_slice %13 {offsets = [24, 0], sizes = [24, 96], strides = [1, 1]} : vector<192x96xf32> to vector<24x96xf32>
    %20 = arith.truncf %19 : vector<24x96xf32> to vector<24x96xbf16>
    %c1 = arith.constant 1 : index
    %c0_14 = arith.constant 0 : index
    %c0_15 = arith.constant 0 : index
    %21 = vector.load %arg13[%c1, %c0_14, %c0_15] : memref<8x24x96xbf16, #tpu.memory_space<vmem>>, vector<1x24x96xbf16>
    %22 = vector.shape_cast %21 : vector<1x24x96xbf16> to vector<24x96xbf16>
    %23 = vector.shape_cast %20 : vector<24x96xbf16> to vector<1x24x96xbf16>
    tpu.vector_store %arg13[%c1, %c0_14, %c0_15], %23 {strides = array<i32>} : memref<8x24x96xbf16, #tpu.memory_space<vmem>>, vector<1x24x96xbf16>,
    %24 = vector.extract_strided_slice %13 {offsets = [48, 0], sizes = [24, 96], strides = [1, 1]} : vector<192x96xf32> to vector<24x96xf32>
    %25 = arith.truncf %24 : vector<24x96xf32> to vector<24x96xbf16>
    %c2 = arith.constant 2 : index
    %c0_16 = arith.constant 0 : index
    %c0_17 = arith.constant 0 : index
    %26 = vector.load %arg13[%c2, %c0_16, %c0_17] : memref<8x24x96xbf16, #tpu.memory_space<vmem>>, vector<1x24x96xbf16>
    %27 = vector.shape_cast %26 : vector<1x24x96xbf16> to vector<24x96xbf16>
    %28 = vector.shape_cast %25 : vector<24x96xbf16> to vector<1x24x96xbf16>
    tpu.vector_store %arg13[%c2, %c0_16, %c0_17], %28 {strides = array<i32>} : memref<8x24x96xbf16, #tpu.memory_space<vmem>>, vector<1x24x96xbf16>,
    %29 = vector.extract_strided_slice %13 {offsets = [72, 0], sizes = [24, 96], strides = [1, 1]} : vector<192x96xf32> to vector<24x96xf32>
    %30 = arith.truncf %29 : vector<24x96xf32> to vector<24x96xbf16>
    %c3 = arith.constant 3 : index
    %c0_18 = arith.constant 0 : index
    %c0_19 = arith.constant 0 : index
    %31 = vector.load %arg13[%c3, %c0_18, %c0_19] : memref<8x24x96xbf16, #tpu.memory_space<vmem>>, vector<1x24x96xbf16>
    %32 = vector.shape_cast %31 : vector<1x24x96xbf16> to vector<24x96xbf16>
    %33 = vector.shape_cast %30 : vector<24x96xbf16> to vector<1x24x96xbf16>
    tpu.vector_store %arg13[%c3, %c0_18, %c0_19], %33 {strides = array<i32>} : memref<8x24x96xbf16, #tpu.memory_space<vmem>>, vector<1x24x96xbf16>,
    %34 = vector.extract_strided_slice %13 {offsets = [96, 0], sizes = [24, 96], strides = [1, 1]} : vector<192x96xf32> to vector<24x96xf32>
    %35 = arith.truncf %34 : vector<24x96xf32> to vector<24x96xbf16>
    %c4 = arith.constant 4 : index
    %c0_20 = arith.constant 0 : index
    %c0_21 = arith.constant 0 : index
    %36 = vector.load %arg13[%c4, %c0_20, %c0_21] : memref<8x24x96xbf16, #tpu.memory_space<vmem>>, vector<1x24x96xbf16>
    %37 = vector.shape_cast %36 : vector<1x24x96xbf16> to vector<24x96xbf16>
    %38 = vector.shape_cast %35 : vector<24x96xbf16> to vector<1x24x96xbf16>
    tpu.vector_store %arg13[%c4, %c0_20, %c0_21], %38 {strides = array<i32>} : memref<8x24x96xbf16, #tpu.memory_space<vmem>>, vector<1x24x96xbf16>,
    %39 = vector.extract_strided_slice %13 {offsets = [120, 0], sizes = [24, 96], strides = [1, 1]} : vector<192x96xf32> to vector<24x96xf32>
    %40 = arith.truncf %39 : vector<24x96xf32> to vector<24x96xbf16>
    %c5 = arith.constant 5 : index
    %c0_22 = arith.constant 0 : index
    %c0_23 = arith.constant 0 : index
    %41 = vector.load %arg13[%c5, %c0_22, %c0_23] : memref<8x24x96xbf16, #tpu.memory_space<vmem>>, vector<1x24x96xbf16>
    %42 = vector.shape_cast %41 : vector<1x24x96xbf16> to vector<24x96xbf16>
    %43 = vector.shape_cast %40 : vector<24x96xbf16> to vector<1x24x96xbf16>
    tpu.vector_store %arg13[%c5, %c0_22, %c0_23], %43 {strides = array<i32>} : memref<8x24x96xbf16, #tpu.memory_space<vmem>>, vector<1x24x96xbf16>,
    %44 = vector.extract_strided_slice %13 {offsets = [144, 0], sizes = [24, 96], strides = [1, 1]} : vector<192x96xf32> to vector<24x96xf32>
    %45 = arith.truncf %44 : vector<24x96xf32> to vector<24x96xbf16>
    %c6 = arith.constant 6 : index
    %c0_24 = arith.constant 0 : index
    %c0_25 = arith.constant 0 : index
    %46 = vector.load %arg13[%c6, %c0_24, %c0_25] : memref<8x24x96xbf16, #tpu.memory_space<vmem>>, vector<1x24x96xbf16>
    %47 = vector.shape_cast %46 : vector<1x24x96xbf16> to vector<24x96xbf16>
    %48 = vector.shape_cast %45 : vector<24x96xbf16> to vector<1x24x96xbf16>
    tpu.vector_store %arg13[%c6, %c0_24, %c0_25], %48 {strides = array<i32>} : memref<8x24x96xbf16, #tpu.memory_space<vmem>>, vector<1x24x96xbf16>,
    %49 = vector.extract_strided_slice %13 {offsets = [168, 0], sizes = [24, 96], strides = [1, 1]} : vector<192x96xf32> to vector<24x96xf32>
    %50 = arith.truncf %49 : vector<24x96xf32> to vector<24x96xbf16>
    %c7 = arith.constant 7 : index
    %c0_26 = arith.constant 0 : index
    %c0_27 = arith.constant 0 : index
    %51 = vector.load %arg13[%c7, %c0_26, %c0_27] : memref<8x24x96xbf16, #tpu.memory_space<vmem>>, vector<1x24x96xbf16>
    %52 = vector.shape_cast %51 : vector<1x24x96xbf16> to vector<24x96xbf16>
    %53 = vector.shape_cast %50 : vector<24x96xbf16> to vector<1x24x96xbf16>
    tpu.vector_store %arg13[%c7, %c0_26, %c0_27], %53 {strides = array<i32>} : memref<8x24x96xbf16, #tpu.memory_space<vmem>>, vector<1x24x96xbf16>,
    %cst_28 = arith.constant 0.000000e+00 : f32
    %54 = vector.broadcast %cst_28 : f32 to vector<24x32xf32>
    %c0_i32 = arith.constant 0 : i32
    %55 = arith.index_cast %c0_i32 : i32 to index
    %c0_29 = arith.constant 0 : index
    %c0_30 = arith.constant 0 : index
    %56 = vector.load %arg13[%55, %c0_29, %c0_30] : memref<8x24x96xbf16, #tpu.memory_space<vmem>>, vector<1x24x96xbf16>
    %57 = vector.shape_cast %56 : vector<1x24x96xbf16> to vector<24x96xbf16>
    %58 = arith.extf %57 : vector<24x96xbf16> to vector<24x96xf32>
    %59 = arith.truncf %54 : vector<24x32xf32> to vector<24x32xbf16>
    %c0_31 = arith.constant 0 : index
    %c0_32 = arith.constant 0 : index
    %60 = vector.load %arg5[%c0_31, %c0_32] : memref<32x96xbf16, #tpu.memory_space<vmem>>, vector<32x96xbf16>
    %cst_33 = arith.constant dense<0.000000e+00> : vector<24x96xf32>
    %61 = tpu.matmul %59, %60, %cst_33 {dimension_numbers = #tpu.dot_dimension_numbers<[1], [0], [0], [1], [0, 0, 1, 1], [], []>} : vector<24x32xbf16>, vector<32x96xbf16>, vector<24x96xf32> -> vector<24x96xf32>
    %c0_34 = arith.constant 0 : index
    %c0_35 = arith.constant 0 : index
    %62 = vector.load %arg6[%c0_34, %c0_35] : memref<1x96xf32, #tpu.memory_space<vmem>>, vector<1x96xf32>
    %63 = vector.broadcast %62 : vector<1x96xf32> to vector<24x96xf32>
    %64 = arith.addf %61, %63 : vector<24x96xf32>
    %65 = vector.extract_strided_slice %58 {offsets = [0, 0], sizes = [24, 32], strides = [1, 1]} : vector<24x96xf32> to vector<24x32xf32>
    %66 = vector.extract_strided_slice %64 {offsets = [0, 0], sizes = [24, 32], strides = [1, 1]} : vector<24x96xf32> to vector<24x32xf32>
    %67 = arith.addf %65, %66 : vector<24x32xf32>
    %68 = arith.negf %67 : vector<24x32xf32>
    %69 = math.exp %68 : vector<24x32xf32>
    %cst_36 = arith.constant 1.000000e+00 : f32
    %70 = vector.broadcast %cst_36 : f32 to vector<24x32xf32>
    %71 = arith.addf %70, %69 : vector<24x32xf32>
    %72 = arith.divf %70, %71 : vector<24x32xf32>
    %73 = vector.extract_strided_slice %58 {offsets = [0, 32], sizes = [24, 32], strides = [1, 1]} : vector<24x96xf32> to vector<24x32xf32>
    %74 = vector.extract_strided_slice %64 {offsets = [0, 32], sizes = [24, 32], strides = [1, 1]} : vector<24x96xf32> to vector<24x32xf32>
    %75 = arith.addf %73, %74 : vector<24x32xf32>
    %76 = arith.negf %75 : vector<24x32xf32>
    %77 = math.exp %76 : vector<24x32xf32>
    %cst_37 = arith.constant 1.000000e+00 : f32
    %78 = vector.broadcast %cst_37 : f32 to vector<24x32xf32>
    %79 = arith.addf %78, %77 : vector<24x32xf32>
    %80 = arith.divf %78, %79 : vector<24x32xf32>
    %81 = vector.extract_strided_slice %58 {offsets = [0, 64], sizes = [24, 32], strides = [1, 1]} : vector<24x96xf32> to vector<24x32xf32>
    %82 = vector.extract_strided_slice %64 {offsets = [0, 64], sizes = [24, 32], strides = [1, 1]} : vector<24x96xf32> to vector<24x32xf32>
    %83 = arith.mulf %72, %82 : vector<24x32xf32>
    %84 = arith.addf %81, %83 : vector<24x32xf32>
    %85 = math.tanh %84 : vector<24x32xf32>
    %cst_38 = arith.constant 1.000000e+00 : f32
    %86 = vector.broadcast %cst_38 : f32 to vector<24x32xf32>
    %87 = arith.subf %86, %80 : vector<24x32xf32>
    %88 = arith.mulf %87, %85 : vector<24x32xf32>
    %89 = arith.mulf %80, %54 : vector<24x32xf32>
    %90 = arith.addf %88, %89 : vector<24x32xf32>
    %c1_i32 = arith.constant 1 : i32
    %91 = arith.index_cast %c1_i32 : i32 to index
    %c0_39 = arith.constant 0 : index
    %c0_40 = arith.constant 0 : index
    %92 = vector.load %arg13[%91, %c0_39, %c0_40] : memref<8x24x96xbf16, #tpu.memory_space<vmem>>, vector<1x24x96xbf16>
    %93 = vector.shape_cast %92 : vector<1x24x96xbf16> to vector<24x96xbf16>
    %94 = arith.extf %93 : vector<24x96xbf16> to vector<24x96xf32>
    %95 = arith.truncf %90 : vector<24x32xf32> to vector<24x32xbf16>
    %c0_41 = arith.constant 0 : index
    %c0_42 = arith.constant 0 : index
    %96 = vector.load %arg5[%c0_41, %c0_42] : memref<32x96xbf16, #tpu.memory_space<vmem>>, vector<32x96xbf16>
    %cst_43 = arith.constant dense<0.000000e+00> : vector<24x96xf32>
    %97 = tpu.matmul %95, %96, %cst_43 {dimension_numbers = #tpu.dot_dimension_numbers<[1], [0], [0], [1], [0, 0, 1, 1], [], []>} : vector<24x32xbf16>, vector<32x96xbf16>, vector<24x96xf32> -> vector<24x96xf32>
    %c0_44 = arith.constant 0 : index
    %c0_45 = arith.constant 0 : index
    %98 = vector.load %arg6[%c0_44, %c0_45] : memref<1x96xf32, #tpu.memory_space<vmem>>, vector<1x96xf32>
    %99 = vector.broadcast %98 : vector<1x96xf32> to vector<24x96xf32>
    %100 = arith.addf %97, %99 : vector<24x96xf32>
    %101 = vector.extract_strided_slice %94 {offsets = [0, 0], sizes = [24, 32], strides = [1, 1]} : vector<24x96xf32> to vector<24x32xf32>
    %102 = vector.extract_strided_slice %100 {offsets = [0, 0], sizes = [24, 32], strides = [1, 1]} : vector<24x96xf32> to vector<24x32xf32>
    %103 = arith.addf %101, %102 : vector<24x32xf32>
    %104 = arith.negf %103 : vector<24x32xf32>
    %105 = math.exp %104 : vector<24x32xf32>
    %cst_46 = arith.constant 1.000000e+00 : f32
    %106 = vector.broadcast %cst_46 : f32 to vector<24x32xf32>
    %107 = arith.addf %106, %105 : vector<24x32xf32>
    %108 = arith.divf %106, %107 : vector<24x32xf32>
    %109 = vector.extract_strided_slice %94 {offsets = [0, 32], sizes = [24, 32], strides = [1, 1]} : vector<24x96xf32> to vector<24x32xf32>
    %110 = vector.extract_strided_slice %100 {offsets = [0, 32], sizes = [24, 32], strides = [1, 1]} : vector<24x96xf32> to vector<24x32xf32>
    %111 = arith.addf %109, %110 : vector<24x32xf32>
    %112 = arith.negf %111 : vector<24x32xf32>
    %113 = math.exp %112 : vector<24x32xf32>
    %cst_47 = arith.constant 1.000000e+00 : f32
    %114 = vector.broadcast %cst_47 : f32 to vector<24x32xf32>
    %115 = arith.addf %114, %113 : vector<24x32xf32>
    %116 = arith.divf %114, %115 : vector<24x32xf32>
    %117 = vector.extract_strided_slice %94 {offsets = [0, 64], sizes = [24, 32], strides = [1, 1]} : vector<24x96xf32> to vector<24x32xf32>
    %118 = vector.extract_strided_slice %100 {offsets = [0, 64], sizes = [24, 32], strides = [1, 1]} : vector<24x96xf32> to vector<24x32xf32>
    %119 = arith.mulf %108, %118 : vector<24x32xf32>
    %120 = arith.addf %117, %119 : vector<24x32xf32>
    %121 = math.tanh %120 : vector<24x32xf32>
    %cst_48 = arith.constant 1.000000e+00 : f32
    %122 = vector.broadcast %cst_48 : f32 to vector<24x32xf32>
    %123 = arith.subf %122, %116 : vector<24x32xf32>
    %124 = arith.mulf %123, %121 : vector<24x32xf32>
    %125 = arith.mulf %116, %90 : vector<24x32xf32>
    %126 = arith.addf %124, %125 : vector<24x32xf32>
    %c2_i32 = arith.constant 2 : i32
    %127 = arith.index_cast %c2_i32 : i32 to index
    %c0_49 = arith.constant 0 : index
    %c0_50 = arith.constant 0 : index
    %128 = vector.load %arg13[%127, %c0_49, %c0_50] : memref<8x24x96xbf16, #tpu.memory_space<vmem>>, vector<1x24x96xbf16>
    %129 = vector.shape_cast %128 : vector<1x24x96xbf16> to vector<24x96xbf16>
    %130 = arith.extf %129 : vector<24x96xbf16> to vector<24x96xf32>
    %131 = arith.truncf %126 : vector<24x32xf32> to vector<24x32xbf16>
    %c0_51 = arith.constant 0 : index
    %c0_52 = arith.constant 0 : index
    %132 = vector.load %arg5[%c0_51, %c0_52] : memref<32x96xbf16, #tpu.memory_space<vmem>>, vector<32x96xbf16>
    %cst_53 = arith.constant dense<0.000000e+00> : vector<24x96xf32>
    %133 = tpu.matmul %131, %132, %cst_53 {dimension_numbers = #tpu.dot_dimension_numbers<[1], [0], [0], [1], [0, 0, 1, 1], [], []>} : vector<24x32xbf16>, vector<32x96xbf16>, vector<24x96xf32> -> vector<24x96xf32>
    %c0_54 = arith.constant 0 : index
    %c0_55 = arith.constant 0 : index
    %134 = vector.load %arg6[%c0_54, %c0_55] : memref<1x96xf32, #tpu.memory_space<vmem>>, vector<1x96xf32>
    %135 = vector.broadcast %134 : vector<1x96xf32> to vector<24x96xf32>
    %136 = arith.addf %133, %135 : vector<24x96xf32>
    %137 = vector.extract_strided_slice %130 {offsets = [0, 0], sizes = [24, 32], strides = [1, 1]} : vector<24x96xf32> to vector<24x32xf32>
    %138 = vector.extract_strided_slice %136 {offsets = [0, 0], sizes = [24, 32], strides = [1, 1]} : vector<24x96xf32> to vector<24x32xf32>
    %139 = arith.addf %137, %138 : vector<24x32xf32>
    %140 = arith.negf %139 : vector<24x32xf32>
    %141 = math.exp %140 : vector<24x32xf32>
    %cst_56 = arith.constant 1.000000e+00 : f32
    %142 = vector.broadcast %cst_56 : f32 to vector<24x32xf32>
    %143 = arith.addf %142, %141 : vector<24x32xf32>
    %144 = arith.divf %142, %143 : vector<24x32xf32>
    %145 = vector.extract_strided_slice %130 {offsets = [0, 32], sizes = [24, 32], strides = [1, 1]} : vector<24x96xf32> to vector<24x32xf32>
    %146 = vector.extract_strided_slice %136 {offsets = [0, 32], sizes = [24, 32], strides = [1, 1]} : vector<24x96xf32> to vector<24x32xf32>
    %147 = arith.addf %145, %146 : vector<24x32xf32>
    %148 = arith.negf %147 : vector<24x32xf32>
    %149 = math.exp %148 : vector<24x32xf32>
    %cst_57 = arith.constant 1.000000e+00 : f32
    %150 = vector.broadcast %cst_57 : f32 to vector<24x32xf32>
    %151 = arith.addf %150, %149 : vector<24x32xf32>
    %152 = arith.divf %150, %151 : vector<24x32xf32>
    %153 = vector.extract_strided_slice %130 {offsets = [0, 64], sizes = [24, 32], strides = [1, 1]} : vector<24x96xf32> to vector<24x32xf32>
    %154 = vector.extract_strided_slice %136 {offsets = [0, 64], sizes = [24, 32], strides = [1, 1]} : vector<24x96xf32> to vector<24x32xf32>
    %155 = arith.mulf %144, %154 : vector<24x32xf32>
    %156 = arith.addf %153, %155 : vector<24x32xf32>
    %157 = math.tanh %156 : vector<24x32xf32>
    %cst_58 = arith.constant 1.000000e+00 : f32
    %158 = vector.broadcast %cst_58 : f32 to vector<24x32xf32>
    %159 = arith.subf %158, %152 : vector<24x32xf32>
    %160 = arith.mulf %159, %157 : vector<24x32xf32>
    %161 = arith.mulf %152, %126 : vector<24x32xf32>
    %162 = arith.addf %160, %161 : vector<24x32xf32>
    %c3_i32 = arith.constant 3 : i32
    %163 = arith.index_cast %c3_i32 : i32 to index
    %c0_59 = arith.constant 0 : index
    %c0_60 = arith.constant 0 : index
    %164 = vector.load %arg13[%163, %c0_59, %c0_60] : memref<8x24x96xbf16, #tpu.memory_space<vmem>>, vector<1x24x96xbf16>
    %165 = vector.shape_cast %164 : vector<1x24x96xbf16> to vector<24x96xbf16>
    %166 = arith.extf %165 : vector<24x96xbf16> to vector<24x96xf32>
    %167 = arith.truncf %162 : vector<24x32xf32> to vector<24x32xbf16>
    %c0_61 = arith.constant 0 : index
    %c0_62 = arith.constant 0 : index
    %168 = vector.load %arg5[%c0_61, %c0_62] : memref<32x96xbf16, #tpu.memory_space<vmem>>, vector<32x96xbf16>
    %cst_63 = arith.constant dense<0.000000e+00> : vector<24x96xf32>
    %169 = tpu.matmul %167, %168, %cst_63 {dimension_numbers = #tpu.dot_dimension_numbers<[1], [0], [0], [1], [0, 0, 1, 1], [], []>} : vector<24x32xbf16>, vector<32x96xbf16>, vector<24x96xf32> -> vector<24x96xf32>
    %c0_64 = arith.constant 0 : index
    %c0_65 = arith.constant 0 : index
    %170 = vector.load %arg6[%c0_64, %c0_65] : memref<1x96xf32, #tpu.memory_space<vmem>>, vector<1x96xf32>
    %171 = vector.broadcast %170 : vector<1x96xf32> to vector<24x96xf32>
    %172 = arith.addf %169, %171 : vector<24x96xf32>
    %173 = vector.extract_strided_slice %166 {offsets = [0, 0], sizes = [24, 32], strides = [1, 1]} : vector<24x96xf32> to vector<24x32xf32>
    %174 = vector.extract_strided_slice %172 {offsets = [0, 0], sizes = [24, 32], strides = [1, 1]} : vector<24x96xf32> to vector<24x32xf32>
    %175 = arith.addf %173, %174 : vector<24x32xf32>
    %176 = arith.negf %175 : vector<24x32xf32>
    %177 = math.exp %176 : vector<24x32xf32>
    %cst_66 = arith.constant 1.000000e+00 : f32
    %178 = vector.broadcast %cst_66 : f32 to vector<24x32xf32>
    %179 = arith.addf %178, %177 : vector<24x32xf32>
    %180 = arith.divf %178, %179 : vector<24x32xf32>
    %181 = vector.extract_strided_slice %166 {offsets = [0, 32], sizes = [24, 32], strides = [1, 1]} : vector<24x96xf32> to vector<24x32xf32>
    %182 = vector.extract_strided_slice %172 {offsets = [0, 32], sizes = [24, 32], strides = [1, 1]} : vector<24x96xf32> to vector<24x32xf32>
    %183 = arith.addf %181, %182 : vector<24x32xf32>
    %184 = arith.negf %183 : vector<24x32xf32>
    %185 = math.exp %184 : vector<24x32xf32>
    %cst_67 = arith.constant 1.000000e+00 : f32
    %186 = vector.broadcast %cst_67 : f32 to vector<24x32xf32>
    %187 = arith.addf %186, %185 : vector<24x32xf32>
    %188 = arith.divf %186, %187 : vector<24x32xf32>
    %189 = vector.extract_strided_slice %166 {offsets = [0, 64], sizes = [24, 32], strides = [1, 1]} : vector<24x96xf32> to vector<24x32xf32>
    %190 = vector.extract_strided_slice %172 {offsets = [0, 64], sizes = [24, 32], strides = [1, 1]} : vector<24x96xf32> to vector<24x32xf32>
    %191 = arith.mulf %180, %190 : vector<24x32xf32>
    %192 = arith.addf %189, %191 : vector<24x32xf32>
    %193 = math.tanh %192 : vector<24x32xf32>
    %cst_68 = arith.constant 1.000000e+00 : f32
    %194 = vector.broadcast %cst_68 : f32 to vector<24x32xf32>
    %195 = arith.subf %194, %188 : vector<24x32xf32>
    %196 = arith.mulf %195, %193 : vector<24x32xf32>
    %197 = arith.mulf %188, %162 : vector<24x32xf32>
    %198 = arith.addf %196, %197 : vector<24x32xf32>
    %c4_i32 = arith.constant 4 : i32
    %199 = arith.index_cast %c4_i32 : i32 to index
    %c0_69 = arith.constant 0 : index
    %c0_70 = arith.constant 0 : index
    %200 = vector.load %arg13[%199, %c0_69, %c0_70] : memref<8x24x96xbf16, #tpu.memory_space<vmem>>, vector<1x24x96xbf16>
    %201 = vector.shape_cast %200 : vector<1x24x96xbf16> to vector<24x96xbf16>
    %202 = arith.extf %201 : vector<24x96xbf16> to vector<24x96xf32>
    %203 = arith.truncf %198 : vector<24x32xf32> to vector<24x32xbf16>
    %c0_71 = arith.constant 0 : index
    %c0_72 = arith.constant 0 : index
    %204 = vector.load %arg5[%c0_71, %c0_72] : memref<32x96xbf16, #tpu.memory_space<vmem>>, vector<32x96xbf16>
    %cst_73 = arith.constant dense<0.000000e+00> : vector<24x96xf32>
    %205 = tpu.matmul %203, %204, %cst_73 {dimension_numbers = #tpu.dot_dimension_numbers<[1], [0], [0], [1], [0, 0, 1, 1], [], []>} : vector<24x32xbf16>, vector<32x96xbf16>, vector<24x96xf32> -> vector<24x96xf32>
    %c0_74 = arith.constant 0 : index
    %c0_75 = arith.constant 0 : index
    %206 = vector.load %arg6[%c0_74, %c0_75] : memref<1x96xf32, #tpu.memory_space<vmem>>, vector<1x96xf32>
    %207 = vector.broadcast %206 : vector<1x96xf32> to vector<24x96xf32>
    %208 = arith.addf %205, %207 : vector<24x96xf32>
    %209 = vector.extract_strided_slice %202 {offsets = [0, 0], sizes = [24, 32], strides = [1, 1]} : vector<24x96xf32> to vector<24x32xf32>
    %210 = vector.extract_strided_slice %208 {offsets = [0, 0], sizes = [24, 32], strides = [1, 1]} : vector<24x96xf32> to vector<24x32xf32>
    %211 = arith.addf %209, %210 : vector<24x32xf32>
    %212 = arith.negf %211 : vector<24x32xf32>
    %213 = math.exp %212 : vector<24x32xf32>
    %cst_76 = arith.constant 1.000000e+00 : f32
    %214 = vector.broadcast %cst_76 : f32 to vector<24x32xf32>
    %215 = arith.addf %214, %213 : vector<24x32xf32>
    %216 = arith.divf %214, %215 : vector<24x32xf32>
    %217 = vector.extract_strided_slice %202 {offsets = [0, 32], sizes = [24, 32], strides = [1, 1]} : vector<24x96xf32> to vector<24x32xf32>
    %218 = vector.extract_strided_slice %208 {offsets = [0, 32], sizes = [24, 32], strides = [1, 1]} : vector<24x96xf32> to vector<24x32xf32>
    %219 = arith.addf %217, %218 : vector<24x32xf32>
    %220 = arith.negf %219 : vector<24x32xf32>
    %221 = math.exp %220 : vector<24x32xf32>
    %cst_77 = arith.constant 1.000000e+00 : f32
    %222 = vector.broadcast %cst_77 : f32 to vector<24x32xf32>
    %223 = arith.addf %222, %221 : vector<24x32xf32>
    %224 = arith.divf %222, %223 : vector<24x32xf32>
    %225 = vector.extract_strided_slice %202 {offsets = [0, 64], sizes = [24, 32], strides = [1, 1]} : vector<24x96xf32> to vector<24x32xf32>
    %226 = vector.extract_strided_slice %208 {offsets = [0, 64], sizes = [24, 32], strides = [1, 1]} : vector<24x96xf32> to vector<24x32xf32>
    %227 = arith.mulf %216, %226 : vector<24x32xf32>
    %228 = arith.addf %225, %227 : vector<24x32xf32>
    %229 = math.tanh %228 : vector<24x32xf32>
    %cst_78 = arith.constant 1.000000e+00 : f32
    %230 = vector.broadcast %cst_78 : f32 to vector<24x32xf32>
    %231 = arith.subf %230, %224 : vector<24x32xf32>
    %232 = arith.mulf %231, %229 : vector<24x32xf32>
    %233 = arith.mulf %224, %198 : vector<24x32xf32>
    %234 = arith.addf %232, %233 : vector<24x32xf32>
    %c5_i32 = arith.constant 5 : i32
    %235 = arith.index_cast %c5_i32 : i32 to index
    %c0_79 = arith.constant 0 : index
    %c0_80 = arith.constant 0 : index
    %236 = vector.load %arg13[%235, %c0_79, %c0_80] : memref<8x24x96xbf16, #tpu.memory_space<vmem>>, vector<1x24x96xbf16>
    %237 = vector.shape_cast %236 : vector<1x24x96xbf16> to vector<24x96xbf16>
    %238 = arith.extf %237 : vector<24x96xbf16> to vector<24x96xf32>
    %239 = arith.truncf %234 : vector<24x32xf32> to vector<24x32xbf16>
    %c0_81 = arith.constant 0 : index
    %c0_82 = arith.constant 0 : index
    %240 = vector.load %arg5[%c0_81, %c0_82] : memref<32x96xbf16, #tpu.memory_space<vmem>>, vector<32x96xbf16>
    %cst_83 = arith.constant dense<0.000000e+00> : vector<24x96xf32>
    %241 = tpu.matmul %239, %240, %cst_83 {dimension_numbers = #tpu.dot_dimension_numbers<[1], [0], [0], [1], [0, 0, 1, 1], [], []>} : vector<24x32xbf16>, vector<32x96xbf16>, vector<24x96xf32> -> vector<24x96xf32>
    %c0_84 = arith.constant 0 : index
    %c0_85 = arith.constant 0 : index
    %242 = vector.load %arg6[%c0_84, %c0_85] : memref<1x96xf32, #tpu.memory_space<vmem>>, vector<1x96xf32>
    %243 = vector.broadcast %242 : vector<1x96xf32> to vector<24x96xf32>
    %244 = arith.addf %241, %243 : vector<24x96xf32>
    %245 = vector.extract_strided_slice %238 {offsets = [0, 0], sizes = [24, 32], strides = [1, 1]} : vector<24x96xf32> to vector<24x32xf32>
    %246 = vector.extract_strided_slice %244 {offsets = [0, 0], sizes = [24, 32], strides = [1, 1]} : vector<24x96xf32> to vector<24x32xf32>
    %247 = arith.addf %245, %246 : vector<24x32xf32>
    %248 = arith.negf %247 : vector<24x32xf32>
    %249 = math.exp %248 : vector<24x32xf32>
    %cst_86 = arith.constant 1.000000e+00 : f32
    %250 = vector.broadcast %cst_86 : f32 to vector<24x32xf32>
    %251 = arith.addf %250, %249 : vector<24x32xf32>
    %252 = arith.divf %250, %251 : vector<24x32xf32>
    %253 = vector.extract_strided_slice %238 {offsets = [0, 32], sizes = [24, 32], strides = [1, 1]} : vector<24x96xf32> to vector<24x32xf32>
    %254 = vector.extract_strided_slice %244 {offsets = [0, 32], sizes = [24, 32], strides = [1, 1]} : vector<24x96xf32> to vector<24x32xf32>
    %255 = arith.addf %253, %254 : vector<24x32xf32>
    %256 = arith.negf %255 : vector<24x32xf32>
    %257 = math.exp %256 : vector<24x32xf32>
    %cst_87 = arith.constant 1.000000e+00 : f32
    %258 = vector.broadcast %cst_87 : f32 to vector<24x32xf32>
    %259 = arith.addf %258, %257 : vector<24x32xf32>
    %260 = arith.divf %258, %259 : vector<24x32xf32>
    %261 = vector.extract_strided_slice %238 {offsets = [0, 64], sizes = [24, 32], strides = [1, 1]} : vector<24x96xf32> to vector<24x32xf32>
    %262 = vector.extract_strided_slice %244 {offsets = [0, 64], sizes = [24, 32], strides = [1, 1]} : vector<24x96xf32> to vector<24x32xf32>
    %263 = arith.mulf %252, %262 : vector<24x32xf32>
    %264 = arith.addf %261, %263 : vector<24x32xf32>
    %265 = math.tanh %264 : vector<24x32xf32>
    %cst_88 = arith.constant 1.000000e+00 : f32
    %266 = vector.broadcast %cst_88 : f32 to vector<24x32xf32>
    %267 = arith.subf %266, %260 : vector<24x32xf32>
    %268 = arith.mulf %267, %265 : vector<24x32xf32>
    %269 = arith.mulf %260, %234 : vector<24x32xf32>
    %270 = arith.addf %268, %269 : vector<24x32xf32>
    %c6_i32 = arith.constant 6 : i32
    %271 = arith.index_cast %c6_i32 : i32 to index
    %c0_89 = arith.constant 0 : index
    %c0_90 = arith.constant 0 : index
    %272 = vector.load %arg13[%271, %c0_89, %c0_90] : memref<8x24x96xbf16, #tpu.memory_space<vmem>>, vector<1x24x96xbf16>
    %273 = vector.shape_cast %272 : vector<1x24x96xbf16> to vector<24x96xbf16>
    %274 = arith.extf %273 : vector<24x96xbf16> to vector<24x96xf32>
    %275 = arith.truncf %270 : vector<24x32xf32> to vector<24x32xbf16>
    %c0_91 = arith.constant 0 : index
    %c0_92 = arith.constant 0 : index
    %276 = vector.load %arg5[%c0_91, %c0_92] : memref<32x96xbf16, #tpu.memory_space<vmem>>, vector<32x96xbf16>
    %cst_93 = arith.constant dense<0.000000e+00> : vector<24x96xf32>
    %277 = tpu.matmul %275, %276, %cst_93 {dimension_numbers = #tpu.dot_dimension_numbers<[1], [0], [0], [1], [0, 0, 1, 1], [], []>} : vector<24x32xbf16>, vector<32x96xbf16>, vector<24x96xf32> -> vector<24x96xf32>
    %c0_94 = arith.constant 0 : index
    %c0_95 = arith.constant 0 : index
    %278 = vector.load %arg6[%c0_94, %c0_95] : memref<1x96xf32, #tpu.memory_space<vmem>>, vector<1x96xf32>
    %279 = vector.broadcast %278 : vector<1x96xf32> to vector<24x96xf32>
    %280 = arith.addf %277, %279 : vector<24x96xf32>
    %281 = vector.extract_strided_slice %274 {offsets = [0, 0], sizes = [24, 32], strides = [1, 1]} : vector<24x96xf32> to vector<24x32xf32>
    %282 = vector.extract_strided_slice %280 {offsets = [0, 0], sizes = [24, 32], strides = [1, 1]} : vector<24x96xf32> to vector<24x32xf32>
    %283 = arith.addf %281, %282 : vector<24x32xf32>
    %284 = arith.negf %283 : vector<24x32xf32>
    %285 = math.exp %284 : vector<24x32xf32>
    %cst_96 = arith.constant 1.000000e+00 : f32
    %286 = vector.broadcast %cst_96 : f32 to vector<24x32xf32>
    %287 = arith.addf %286, %285 : vector<24x32xf32>
    %288 = arith.divf %286, %287 : vector<24x32xf32>
    %289 = vector.extract_strided_slice %274 {offsets = [0, 32], sizes = [24, 32], strides = [1, 1]} : vector<24x96xf32> to vector<24x32xf32>
    %290 = vector.extract_strided_slice %280 {offsets = [0, 32], sizes = [24, 32], strides = [1, 1]} : vector<24x96xf32> to vector<24x32xf32>
    %291 = arith.addf %289, %290 : vector<24x32xf32>
    %292 = arith.negf %291 : vector<24x32xf32>
    %293 = math.exp %292 : vector<24x32xf32>
    %cst_97 = arith.constant 1.000000e+00 : f32
    %294 = vector.broadcast %cst_97 : f32 to vector<24x32xf32>
    %295 = arith.addf %294, %293 : vector<24x32xf32>
    %296 = arith.divf %294, %295 : vector<24x32xf32>
    %297 = vector.extract_strided_slice %274 {offsets = [0, 64], sizes = [24, 32], strides = [1, 1]} : vector<24x96xf32> to vector<24x32xf32>
    %298 = vector.extract_strided_slice %280 {offsets = [0, 64], sizes = [24, 32], strides = [1, 1]} : vector<24x96xf32> to vector<24x32xf32>
    %299 = arith.mulf %288, %298 : vector<24x32xf32>
    %300 = arith.addf %297, %299 : vector<24x32xf32>
    %301 = math.tanh %300 : vector<24x32xf32>
    %cst_98 = arith.constant 1.000000e+00 : f32
    %302 = vector.broadcast %cst_98 : f32 to vector<24x32xf32>
    %303 = arith.subf %302, %296 : vector<24x32xf32>
    %304 = arith.mulf %303, %301 : vector<24x32xf32>
    %305 = arith.mulf %296, %270 : vector<24x32xf32>
    %306 = arith.addf %304, %305 : vector<24x32xf32>
    %c7_i32 = arith.constant 7 : i32
    %307 = arith.index_cast %c7_i32 : i32 to index
    %c0_99 = arith.constant 0 : index
    %c0_100 = arith.constant 0 : index
    %308 = vector.load %arg13[%307, %c0_99, %c0_100] : memref<8x24x96xbf16, #tpu.memory_space<vmem>>, vector<1x24x96xbf16>
    %309 = vector.shape_cast %308 : vector<1x24x96xbf16> to vector<24x96xbf16>
    %310 = arith.extf %309 : vector<24x96xbf16> to vector<24x96xf32>
    %311 = arith.truncf %306 : vector<24x32xf32> to vector<24x32xbf16>
    %c0_101 = arith.constant 0 : index
    %c0_102 = arith.constant 0 : index
    %312 = vector.load %arg5[%c0_101, %c0_102] : memref<32x96xbf16, #tpu.memory_space<vmem>>, vector<32x96xbf16>
    %cst_103 = arith.constant dense<0.000000e+00> : vector<24x96xf32>
    %313 = tpu.matmul %311, %312, %cst_103 {dimension_numbers = #tpu.dot_dimension_numbers<[1], [0], [0], [1], [0, 0, 1, 1], [], []>} : vector<24x32xbf16>, vector<32x96xbf16>, vector<24x96xf32> -> vector<24x96xf32>
    %c0_104 = arith.constant 0 : index
    %c0_105 = arith.constant 0 : index
    %314 = vector.load %arg6[%c0_104, %c0_105] : memref<1x96xf32, #tpu.memory_space<vmem>>, vector<1x96xf32>
    %315 = vector.broadcast %314 : vector<1x96xf32> to vector<24x96xf32>
    %316 = arith.addf %313, %315 : vector<24x96xf32>
    %317 = vector.extract_strided_slice %310 {offsets = [0, 0], sizes = [24, 32], strides = [1, 1]} : vector<24x96xf32> to vector<24x32xf32>
    %318 = vector.extract_strided_slice %316 {offsets = [0, 0], sizes = [24, 32], strides = [1, 1]} : vector<24x96xf32> to vector<24x32xf32>
    %319 = arith.addf %317, %318 : vector<24x32xf32>
    %320 = arith.negf %319 : vector<24x32xf32>
    %321 = math.exp %320 : vector<24x32xf32>
    %cst_106 = arith.constant 1.000000e+00 : f32
    %322 = vector.broadcast %cst_106 : f32 to vector<24x32xf32>
    %323 = arith.addf %322, %321 : vector<24x32xf32>
    %324 = arith.divf %322, %323 : vector<24x32xf32>
    %325 = vector.extract_strided_slice %310 {offsets = [0, 32], sizes = [24, 32], strides = [1, 1]} : vector<24x96xf32> to vector<24x32xf32>
    %326 = vector.extract_strided_slice %316 {offsets = [0, 32], sizes = [24, 32], strides = [1, 1]} : vector<24x96xf32> to vector<24x32xf32>
    %327 = arith.addf %325, %326 : vector<24x32xf32>
    %328 = arith.negf %327 : vector<24x32xf32>
    %329 = math.exp %328 : vector<24x32xf32>
    %cst_107 = arith.constant 1.000000e+00 : f32
    %330 = vector.broadcast %cst_107 : f32 to vector<24x32xf32>
    %331 = arith.addf %330, %329 : vector<24x32xf32>
    %332 = arith.divf %330, %331 : vector<24x32xf32>
    %333 = vector.extract_strided_slice %310 {offsets = [0, 64], sizes = [24, 32], strides = [1, 1]} : vector<24x96xf32> to vector<24x32xf32>
    %334 = vector.extract_strided_slice %316 {offsets = [0, 64], sizes = [24, 32], strides = [1, 1]} : vector<24x96xf32> to vector<24x32xf32>
    %335 = arith.mulf %324, %334 : vector<24x32xf32>
    %336 = arith.addf %333, %335 : vector<24x32xf32>
    %337 = math.tanh %336 : vector<24x32xf32>
    %cst_108 = arith.constant 1.000000e+00 : f32
    %338 = vector.broadcast %cst_108 : f32 to vector<24x32xf32>
    %339 = arith.subf %338, %332 : vector<24x32xf32>
    %340 = arith.mulf %339, %337 : vector<24x32xf32>
    %341 = arith.mulf %332, %306 : vector<24x32xf32>
    %342 = arith.addf %340, %341 : vector<24x32xf32>
    %c8_i32 = arith.constant 8 : i32
    %343 = arith.truncf %342 : vector<24x32xf32> to vector<24x32xbf16>
    %c0_109 = arith.constant 0 : index
    %c0_110 = arith.constant 0 : index
    %344 = vector.load %arg7[%c0_109, %c0_110] : memref<32x128xbf16, #tpu.memory_space<vmem>>, vector<32x128xbf16>
    %cst_111 = arith.constant dense<0.000000e+00> : vector<24x128xf32>
    %345 = tpu.matmul %343, %344, %cst_111 {dimension_numbers = #tpu.dot_dimension_numbers<[1], [0], [0], [1], [0, 0, 1, 1], [], []>} : vector<24x32xbf16>, vector<32x128xbf16>, vector<24x128xf32> -> vector<24x128xf32>
    %c0_112 = arith.constant 0 : index
    %c0_113 = arith.constant 0 : index
    %346 = vector.load %arg8[%c0_112, %c0_113] : memref<1x128xf32, #tpu.memory_space<vmem>>, vector<1x128xf32>
    %347 = vector.broadcast %346 : vector<1x128xf32> to vector<24x128xf32>
    %348 = arith.addf %345, %347 : vector<24x128xf32>
    %c0_114 = arith.constant 0 : index
    %c0_115 = arith.constant 0 : index
    %349 = vector.load %arg11[%c0_114, %c0_115] : memref<24x128xf32, #tpu.memory_space<vmem>>, vector<24x128xf32>
    tpu.vector_store %arg11[%c0_114, %c0_115], %348 {strides = array<i32>} : memref<24x128xf32, #tpu.memory_space<vmem>>, vector<24x128xf32>,
    %350 = vector.extract_strided_slice %348 {offsets = [0, 0], sizes = [8, 128], strides = [1, 1]} : vector<24x128xf32> to vector<8x128xf32>
    %351 = vector.extract_strided_slice %348 {offsets = [8, 0], sizes = [8, 128], strides = [1, 1]} : vector<24x128xf32> to vector<8x128xf32>
    %352 = arith.maximumf %350, %351 : vector<8x128xf32>
    %353 = vector.extract_strided_slice %348 {offsets = [16, 0], sizes = [8, 128], strides = [1, 1]} : vector<24x128xf32> to vector<8x128xf32>
    %354 = arith.maximumf %352, %353 : vector<8x128xf32>
    %355 = arith.mulf %354, %354 : vector<8x128xf32>
    %cst_116 = arith.constant dense<0.000000e+00> : vector<8xf32>
    %356 = vector.multi_reduction <add>, %355, %cst_116 [1] : vector<8x128xf32> to vector<8xf32>
    %357 = vector.shape_cast %356 : vector<8xf32> to vector<8x1xf32>
    %cst_117 = arith.constant 1.000000e-24 : f32
    %358 = vector.broadcast %cst_117 : f32 to vector<8x1xf32>
    %359 = arith.maximumf %357, %358 : vector<8x1xf32>
    %360 = math.rsqrt %359 : vector<8x1xf32>
    %361 = vector.broadcast %360 : vector<8x1xf32> to vector<8x128xf32>
    %362 = arith.mulf %354, %361 : vector<8x128xf32>
    %363 = arith.truncf %362 : vector<8x128xf32> to vector<8x128xbf16>
    %c0_118 = arith.constant 0 : index
    %c0_119 = arith.constant 0 : index
    %364 = vector.load %arg9[%c0_118, %c0_119] : memref<128x128xbf16, #tpu.memory_space<vmem>>, vector<128x128xbf16>
    %cst_120 = arith.constant dense<0.000000e+00> : vector<8x128xf32>
    %365 = tpu.matmul %363, %364, %cst_120 {dimension_numbers = #tpu.dot_dimension_numbers<[1], [0], [0], [1], [0, 0, 1, 1], [], []>} : vector<8x128xbf16>, vector<128x128xbf16>, vector<8x128xf32> -> vector<8x128xf32>
    %c0_121 = arith.constant 0 : index
    %c0_122 = arith.constant 0 : index
    %366 = vector.load %arg10[%c0_121, %c0_122] : memref<1x128xf32, #tpu.memory_space<vmem>>, vector<1x128xf32>
    %367 = vector.broadcast %366 : vector<1x128xf32> to vector<8x128xf32>
    %368 = arith.addf %365, %367 : vector<8x128xf32>
    %c0_123 = arith.constant 0 : index
    %c0_124 = arith.constant 0 : index
    %369 = vector.load %arg12[%c0_123, %c0_124] : memref<8x128xf32, #tpu.memory_space<vmem>>, vector<8x128xf32>
    tpu.vector_store %arg12[%c0_123, %c0_124], %368 {strides = array<i32>} : memref<8x128xf32, #tpu.memory_space<vmem>>, vector<8x128xf32>,
    return
  }
}

</mosaic_0001>

<llo_original>
// kernel: client_max_forward.1
$region0: #{client_max_forward.1}
  #allocation0 [shape = 'u32[]', space=smem, size = 0x4, offset = 0x4, fixed_abs, tag = 'smem constant byte address 0x4 - core index']
  #allocation1 [shape = 'u32[144,128]{1,0:T(1,128)}', space=vmem, size = 0x12000, scoped, tag = 'internal scratch']
  #allocation2 [shape = 'bf16[8,24,96]{2,1,0:T(8,128)(2,1)}', space=vmem, size = 0xc000, scoped, tag = 'scratch operand']
  %s0 = inlined_call_operand.vmem [shape: bf16[192,32], index: 0, kind: input, shape index: {}]
  %s1 = inlined_call_operand.vmem [shape: bf16[32,32], index: 1, kind: input, shape index: {}]
  %s2 = inlined_call_operand.vmem [shape: f32[1,32], index: 2, kind: input, shape index: {}]
  %s3 = inlined_call_operand.vmem [shape: bf16[32,96], index: 3, kind: input, shape index: {}]
  %s4 = inlined_call_operand.vmem [shape: f32[1,96], index: 4, kind: input, shape index: {}]
  %s5 = inlined_call_operand.vmem [shape: bf16[32,96], index: 5, kind: input, shape index: {}]
  %s6 = inlined_call_operand.vmem [shape: f32[1,96], index: 6, kind: input, shape index: {}]
  %s7 = inlined_call_operand.vmem [shape: bf16[32,128], index: 7, kind: input, shape index: {}]
  %s8 = inlined_call_operand.vmem [shape: f32[1,128], index: 8, kind: input, shape index: {}]
  %s9 = inlined_call_operand.vmem [shape: bf16[128,128], index: 9, kind: input, shape index: {}]
  %s10 = inlined_call_operand.vmem [shape: f32[1,128], index: 10, kind: input, shape index: {}]
  %s11 = inlined_call_operand.vmem [shape: f32[24,128], index: 11, kind: output, shape index: {0}]
  %s12 = inlined_call_operand.vmem [shape: f32[8,128], index: 12, kind: output, shape index: {1}]
  %13 = xla_tuple %s11, %s12
  %s14 = sld [smem:[#allocation0]]
  $region62: #{client_max_forward.1} parent=0
    _
  %s16 = ssub.s32 1, %s14
  %s17 = scalar_select 0, %s16, %s14
  // Predicated region
  $region2: #{client_max_forward.1} parent=0 // pred_check
    _
  $region3: #{client_max_forward.1} parent=0 // pred_check_branch
    %19 = sbr.rel (0) target = $region5
  $region4: #{client_max_forward.1} parent=0 // pred_region
    _
  $region5: #{client_max_forward.1} parent=0 // pred_fallthru
    _
  // Predicated region
  $region6: #{client_max_forward.1} parent=0 // pred_check
    _
  $region7: #{client_max_forward.1} parent=0 // pred_check_branch
    %21 = sbr.rel (0) target = $region9
  $region8: #{client_max_forward.1} parent=0 // pred_region
    _
  $region9: #{client_max_forward.1} parent=0 // pred_fallthru
    _
  // Predicated region
  $region10: #{client_max_forward.1} parent=0 // pred_check
    _
  $region11: #{client_max_forward.1} parent=0 // pred_check_branch
    %23 = sbr.rel (0) target = $region13
  $region12: #{client_max_forward.1} parent=0 // pred_region
    _
  $region13: #{client_max_forward.1} parent=0 // pred_fallthru
    _
  // Predicated region
  $region14: #{client_max_forward.1} parent=0 // pred_check
    _
  $region15: #{client_max_forward.1} parent=0 // pred_check_branch
    %25 = sbr.rel (0) target = $region17
  $region16: #{client_max_forward.1} parent=0 // pred_region
    _
  $region17: #{client_max_forward.1} parent=0 // pred_fallthru
    _
  // Predicated region
  $region18: #{client_max_forward.1} parent=0 // pred_check
    _
  $region19: #{client_max_forward.1} parent=0 // pred_check_branch
    %27 = sbr.rel (0) target = $region21
  $region20: #{client_max_forward.1} parent=0 // pred_region
    _
  $region21: #{client_max_forward.1} parent=0 // pred_fallthru
    _
  // Predicated region
  $region22: #{client_max_forward.1} parent=0 // pred_check
    _
  $region23: #{client_max_forward.1} parent=0 // pred_check_branch
    %29 = sbr.rel (0) target = $region25
  $region24: #{client_max_forward.1} parent=0 // pred_region
    _
  $region25: #{client_max_forward.1} parent=0 // pred_fallthru
    _
  // Predicated region
  $region26: #{client_max_forward.1} parent=0 // pred_check
    _
  $region27: #{client_max_forward.1} parent=0 // pred_check_branch
    %31 = sbr.rel (0) target = $region29
  $region28: #{client_max_forward.1} parent=0 // pred_region
    _
  $region29: #{client_max_forward.1} parent=0 // pred_fallthru
    _
  // Predicated region
  $region30: #{client_max_forward.1} parent=0 // pred_check
    _
  $region31: #{client_max_forward.1} parent=0 // pred_check_branch
    %33 = sbr.rel (0) target = $region33
  $region32: #{client_max_forward.1} parent=0 // pred_region
    _
  $region33: #{client_max_forward.1} parent=0 // pred_fallthru
    _
  // Predicated region
  $region34: #{client_max_forward.1} parent=0 // pred_check
    _
  $region35: #{client_max_forward.1} parent=0 // pred_check_branch
    %35 = sbr.rel (0) target = $region37
  $region36: #{client_max_forward.1} parent=0 // pred_region
    _
  $region37: #{client_max_forward.1} parent=0 // pred_fallthru
    _
  // Predicated region
  $region38: #{client_max_forward.1} parent=0 // pred_check
    _
  $region39: #{client_max_forward.1} parent=0 // pred_check_branch
    %37 = sbr.rel (0) target = $region41
  $region40: #{client_max_forward.1} parent=0 // pred_region
    _
  $region41: #{client_max_forward.1} parent=0 // pred_fallthru
    _
  // Predicated region
  $region42: #{client_max_forward.1} parent=0 // pred_check
    _
  $region43: #{client_max_forward.1} parent=0 // pred_check_branch
    %39 = sbr.rel (0) target = $region45
  $region44: #{client_max_forward.1} parent=0 // pred_region
    _
  $region45: #{client_max_forward.1} parent=0 // pred_fallthru
    _
  %v41 = vld [vmem:[%s0] sm:$0xf]
  %v42 = vld [vmem:[%s0 + $0x4] sm:$0xf]
  %v43 = vld [vmem:[%s0 + $0x8] sm:$0xf]
  %v44 = vld [vmem:[%s0 + $0xc] sm:$0xf]
  %v45 = vld [vmem:[%s0 + $0x10] sm:$0xf]
  %v46 = vld [vmem:[%s0 + $0x14] sm:$0xf]
  %v47 = vld [vmem:[%s0 + $0x18] sm:$0xf]
  %v48 = vld [vmem:[%s0 + $0x1c] sm:$0xf]
  %v49 = vld [vmem:[%s0 + $0x20] sm:$0xf]
  %v50 = vld [vmem:[%s0 + $0x24] sm:$0xf]
  %v51 = vld [vmem:[%s0 + $0x28] sm:$0xf]
  %v52 = vld [vmem:[%s0 + $0x2c] sm:$0xf]
  %v53 = vld [vmem:[%s0 + $0x30] sm:$0xf]
  %v54 = vld [vmem:[%s0 + $0x34] sm:$0xf]
  %v55 = vld [vmem:[%s0 + $0x38] sm:$0xf]
  %v56 = vld [vmem:[%s0 + $0x3c] sm:$0xf]
  %v57 = vld [vmem:[%s0 + $0x40] sm:$0xf]
  %v58 = vld [vmem:[%s0 + $0x44] sm:$0xf]
  %v59 = vld [vmem:[%s0 + $0x48] sm:$0xf]
  %v60 = vld [vmem:[%s0 + $0x4c] sm:$0xf]
  %v61 = vld [vmem:[%s0 + $0x50] sm:$0xf]
  %v62 = vld [vmem:[%s0 + $0x54] sm:$0xf]
  %v63 = vld [vmem:[%s0 + $0x58] sm:$0xf]
  %v64 = vld [vmem:[%s0 + $0x5c] sm:$0xf]
  %v65 = vld [vmem:[%s1] sm:$0xf]
  %v66 = vld [vmem:[%s1 + $0x4] sm:$0xf]
  %v67 = vld [vmem:[%s1 + $0x8] sm:$0xf]
  %v68 = vld [vmem:[%s1 + $0xc] sm:$0xf]
  %v69 = vld [vmem:[%s2] sm:$0x1]
  %v71 = vlaneseq
  %v72 = vshrl.u32 %v71, 7
  %v73 = vsub.s32 0, %v72
  %v74 = vrot.slane %v69, %v73
  %v100 = vunpack.c.l.b16 %v41
  %v101 = vunpack.c.l.b16 %v42
  %v102 = vunpack.c.l.b16 %v43
  %v103 = vunpack.c.l.b16 %v44
  %v104 = vunpack.c.l.b16 %v45
  %v105 = vunpack.c.l.b16 %v46
  %v106 = vunpack.c.l.b16 %v47
  %v107 = vunpack.c.l.b16 %v48
  %v108 = vunpack.c.l.b16 %v49
  %v109 = vunpack.c.l.b16 %v50
  %v110 = vunpack.c.l.b16 %v51
  %v111 = vunpack.c.l.b16 %v52
  %v112 = vunpack.c.l.b16 %v53
  %v113 = vunpack.c.l.b16 %v54
  %v114 = vunpack.c.l.b16 %v55
  %v115 = vunpack.c.l.b16 %v56
  %v116 = vunpack.c.l.b16 %v57
  %v117 = vunpack.c.l.b16 %v58
  %v118 = vunpack.c.l.b16 %v59
  %v119 = vunpack.c.l.b16 %v60
  %v120 = vunpack.c.l.b16 %v61
  %v121 = vunpack.c.l.b16 %v62
  %v122 = vunpack.c.l.b16 %v63
  %v123 = vunpack.c.l.b16 %v64
  %v124 = vpack.c.b16 %v101, %v100
  %v125 = vpack.c.b16 %v103, %v102
  %v126 = vpack.c.b16 %v105, %v104
  %v127 = vpack.c.b16 %v107, %v106
  %v128 = vpack.c.b16 %v109, %v108
  %v129 = vpack.c.b16 %v111, %v110
  %v130 = vpack.c.b16 %v113, %v112
  %v131 = vpack.c.b16 %v115, %v114
  %v132 = vpack.c.b16 %v117, %v116
  %v133 = vpack.c.b16 %v119, %v118
  %v134 = vpack.c.b16 %v121, %v120
  %v135 = vpack.c.b16 %v123, %v122
  %v140 = vunpack.c.l.b16 %v65
  %v141 = vunpack.c.l.b16 %v66
  %v142 = vunpack.c.l.b16 %v67
  %v143 = vunpack.c.l.b16 %v68
  %v144 = vpack.c.b16 %v141, %v140
  %v145 = vpack.c.b16 %v143, %v142
  %vm148 = vcmask 261120
  %v150 = vsel %vm148, %v124, 0
  %v153 = vsel %vm148, %v125, 0
  %v156 = vsel %vm148, %v126, 0
  %v159 = vsel %vm148, %v127, 0
  %v162 = vsel %vm148, %v128, 0
  %v165 = vsel %vm148, %v129, 0
  %v168 = vsel %vm148, %v130, 0
  %v171 = vsel %vm148, %v131, 0
  %v174 = vsel %vm148, %v132, 0
  %v177 = vsel %vm148, %v133, 0
  %v180 = vsel %vm148, %v134, 0
  %v183 = vsel %vm148, %v135, 0
  %185 = vmatprep.subr.bf16.mxu0 0
  %186 = vmatpush1.bf16.msra.mxu0 %v144
  %187 = vmatprep.subr.bf16.mxu0 0
  %188 = vmatpush1.bf16.msra.mxu0 %v145
  %189 = vmatprep.subr.bf16.mxu0 0
  %190 = vmatpush1.bf16.msra.mxu0 0
  %191 = vmatprep.subr.bf16.mxu0 0
  %192 = vmatpush1.bf16.msra.mxu0 0
  %193 = vmatprep.subr.bf16.mxu0 0
  %194 = vmatpush1.bf16.msra.mxu0 0
  %195 = vmatprep.subr.bf16.mxu0 0
  %196 = vmatpush1.bf16.msra.mxu0 0
  %197 = vmatprep.subr.bf16.mxu0 0
  %198 = vmatpush1.bf16.msra.mxu0 0
  %199 = vmatprep.subr.bf16.mxu0 0
  %200 = vmatpush1.bf16.msra.mxu0 0
  %201 = vmatprep.subr.bf16.mxu0 0
  %202 = vmatpush1.bf16.msra.mxu0 0
  %203 = vmatprep.subr.bf16.mxu0 0
  %204 = vmatpush1.bf16.msra.mxu0 0
  %205 = vmatprep.subr.bf16.mxu0 0
  %206 = vmatpush1.bf16.msra.mxu0 0
  %207 = vmatprep.subr.bf16.mxu0 0
  %208 = vmatpush1.bf16.msra.mxu0 0
  %209 = vmatprep.subr.bf16.mxu0 0
  %210 = vmatpush1.bf16.msra.mxu0 0
  %211 = vmatprep.subr.bf16.mxu0 0
  %212 = vmatpush1.bf16.msra.mxu0 0
  %213 = vmatprep.subr.bf16.mxu0 0
  %214 = vmatpush1.bf16.msra.mxu0 0
  %215 = vmatprep.subr.bf16.mxu0 0
  %216 = vmatpush1.bf16.msra.mxu0 0
  %217 = vmatprep.mubr.bf16.mxu0 0
  %218 = vmatmul.mubr.bf16.gmra.mrb[0].mxu0 %v150
  %v219 = vpop.f32.mrb[0].mxu0
  %v220 = vadd.f32 %v74, %v219
  %v221 = vpop.f32.mrb[0].mxu0
  %v222 = vpop.f32.mrb[0].mxu0
  %v223 = vadd.f32 %v74, %v222
  %v224 = vpop.f32.mrb[0].mxu0
  %225 = vmatprep.mubr.bf16.mxu0 0
  %226 = vmatmul.mubr.bf16.gmra.mrb[0].mxu0 %v153
  %v227 = vpop.f32.mrb[0].mxu0
  %v228 = vadd.f32 %v74, %v227
  %v229 = vpop.f32.mrb[0].mxu0
  %v230 = vpop.f32.mrb[0].mxu0
  %v231 = vadd.f32 %v74, %v230
  %v232 = vpop.f32.mrb[0].mxu0
  %233 = vmatprep.mubr.bf16.mxu0 0
  %234 = vmatmul.mubr.bf16.gmra.mrb[0].mxu0 %v156
  %v235 = vpop.f32.mrb[0].mxu0
  %v236 = vadd.f32 %v74, %v235
  %v237 = vpop.f32.mrb[0].mxu0
  %v238 = vpop.f32.mrb[0].mxu0
  %v239 = vadd.f32 %v74, %v238
  %v240 = vpop.f32.mrb[0].mxu0
  %241 = vmatprep.mubr.bf16.mxu0 0
  %242 = vmatmul.mubr.bf16.gmra.mrb[0].mxu0 %v159
  %v243 = vpop.f32.mrb[0].mxu0
  %v244 = vadd.f32 %v74, %v243
  %v245 = vpop.f32.mrb[0].mxu0
  %v246 = vpop.f32.mrb[0].mxu0
  %v247 = vadd.f32 %v74, %v246
  %v248 = vpop.f32.mrb[0].mxu0
  %249 = vmatprep.mubr.bf16.mxu0 0
  %250 = vmatmul.mubr.bf16.gmra.mrb[0].mxu0 %v162
  %v251 = vpop.f32.mrb[0].mxu0
  %v252 = vadd.f32 %v74, %v251
  %v253 = vpop.f32.mrb[0].mxu0
  %v254 = vpop.f32.mrb[0].mxu0
  %v255 = vadd.f32 %v74, %v254
  %v256 = vpop.f32.mrb[0].mxu0
  %257 = vmatprep.mubr.bf16.mxu0 0
  %258 = vmatmul.mubr.bf16.gmra.mrb[0].mxu0 %v165
  %v259 = vpop.f32.mrb[0].mxu0
  %v260 = vadd.f32 %v74, %v259
  %v261 = vpop.f32.mrb[0].mxu0
  %v262 = vpop.f32.mrb[0].mxu0
  %v263 = vadd.f32 %v74, %v262
  %v264 = vpop.f32.mrb[0].mxu0
  %265 = vmatprep.mubr.bf16.mxu0 0
  %266 = vmatmul.mubr.bf16.gmra.mrb[0].mxu0 %v168
  %v267 = vpop.f32.mrb[0].mxu0
  %v268 = vadd.f32 %v74, %v267
  %v269 = vpop.f32.mrb[0].mxu0
  %v270 = vpop.f32.mrb[0].mxu0
  %v271 = vadd.f32 %v74, %v270
  %v272 = vpop.f32.mrb[0].mxu0
  %273 = vmatprep.mubr.bf16.mxu0 0
  %274 = vmatmul.mubr.bf16.gmra.mrb[0].mxu0 %v171
  %v275 = vpop.f32.mrb[0].mxu0
  %v276 = vadd.f32 %v74, %v275
  %v277 = vpop.f32.mrb[0].mxu0
  %v278 = vpop.f32.mrb[0].mxu0
  %v279 = vadd.f32 %v74, %v278
  %v280 = vpop.f32.mrb[0].mxu0
  %281 = vmatprep.mubr.bf16.mxu0 0
  %282 = vmatmul.mubr.bf16.gmra.mrb[0].mxu0 %v174
  %v283 = vpop.f32.mrb[0].mxu0
  %v284 = vadd.f32 %v74, %v283
  %v285 = vpop.f32.mrb[0].mxu0
  %v286 = vpop.f32.mrb[0].mxu0
  %v287 = vadd.f32 %v74, %v286
  %v288 = vpop.f32.mrb[0].mxu0
  %289 = vmatprep.mubr.bf16.mxu0 0
  %290 = vmatmul.mubr.bf16.gmra.mrb[0].mxu0 %v177
  %v291 = vpop.f32.mrb[0].mxu0
  %v292 = vadd.f32 %v74, %v291
  %v293 = vpop.f32.mrb[0].mxu0
  %v294 = vpop.f32.mrb[0].mxu0
  %v295 = vadd.f32 %v74, %v294
  %v296 = vpop.f32.mrb[0].mxu0
  %297 = vmatprep.mubr.bf16.mxu0 0
  %298 = vmatmul.mubr.bf16.gmra.mrb[0].mxu0 %v180
  %v299 = vpop.f32.mrb[0].mxu0
  %v300 = vadd.f32 %v74, %v299
  %v301 = vpop.f32.mrb[0].mxu0
  %v302 = vpop.f32.mrb[0].mxu0
  %v303 = vadd.f32 %v74, %v302
  %v304 = vpop.f32.mrb[0].mxu0
  %305 = vmatprep.mubr.bf16.mxu0 0
  %306 = vmatmul.mubr.bf16.gmra.mrb[0].mxu0 %v183
  %v307 = vpop.f32.mrb[0].mxu0
  %v308 = vadd.f32 %v74, %v307
  %v309 = vpop.f32.mrb[0].mxu0
  %v310 = vpop.f32.mrb[0].mxu0
  %v311 = vadd.f32 %v74, %v310
  %v312 = vpop.f32.mrb[0].mxu0
  %313 = vdwg.mxu0
  %v314 = vmax.f32 %v220, 0.0
  %v315 = vmax.f32 %v223, 0.0
  %v316 = vmax.f32 %v228, 0.0
  %v317 = vmax.f32 %v231, 0.0
  %v318 = vmax.f32 %v236, 0.0
  %v319 = vmax.f32 %v239, 0.0
  %v320 = vmax.f32 %v244, 0.0
  %v321 = vmax.f32 %v247, 0.0
  %v322 = vmax.f32 %v252, 0.0
  %v323 = vmax.f32 %v255, 0.0
  %v324 = vmax.f32 %v260, 0.0
  %v325 = vmax.f32 %v263, 0.0
  %v326 = vmax.f32 %v268, 0.0
  %v327 = vmax.f32 %v271, 0.0
  %v328 = vmax.f32 %v276, 0.0
  %v329 = vmax.f32 %v279, 0.0
  %v330 = vmax.f32 %v284, 0.0
  %v331 = vmax.f32 %v287, 0.0
  %v332 = vmax.f32 %v292, 0.0
  %v333 = vmax.f32 %v295, 0.0
  %v334 = vmax.f32 %v300, 0.0
  %v335 = vmax.f32 %v303, 0.0
  %v336 = vmax.f32 %v308, 0.0
  %v337 = vmax.f32 %v311, 0.0
  %v338 = vpack.c.bf16 %v315, %v314
  %v339 = vpack.c.bf16 %v317, %v316
  %v340 = vpack.c.bf16 %v319, %v318
  %v341 = vpack.c.bf16 %v321, %v320
  %v342 = vpack.c.bf16 %v323, %v322
  %v343 = vpack.c.bf16 %v325, %v324
  %v344 = vpack.c.bf16 %v327, %v326
  %v345 = vpack.c.bf16 %v329, %v328
  %v346 = vpack.c.bf16 %v331, %v330
  %v347 = vpack.c.bf16 %v333, %v332
  %v348 = vpack.c.bf16 %v335, %v334
  %v349 = vpack.c.bf16 %v337, %v336
  %v350 = vld [vmem:[%s3] sm:$0xf]
  %v351 = vld [vmem:[%s3 + $0x4] sm:$0xf]
  %v352 = vld [vmem:[%s3 + $0x8] sm:$0xf]
  %v353 = vld [vmem:[%s3 + $0xc] sm:$0xf]
  %v354 = vld [vmem:[%s4] sm:$0x1]
  %v356 = vlaneseq
  %v357 = vshrl.u32 %v356, 7
  %v358 = vsub.s32 0, %v357
  %v359 = vrot.slane %v354, %v358
  %v365 = vunpack.c.l.b16 %v350
  %v366 = vunpack.c.l.b16 %v351
  %v367 = vunpack.c.l.b16 %v352
  %v368 = vunpack.c.l.b16 %v353
  %v369 = vpack.c.b16 %v366, %v365
  %v370 = vpack.c.b16 %v368, %v367
  %v374 = vsel %vm148, %v338, 0
  %v377 = vsel %vm148, %v339, 0
  %v380 = vsel %vm148, %v340, 0
  %v383 = vsel %vm148, %v341, 0
  %v386 = vsel %vm148, %v342, 0
  %v389 = vsel %vm148, %v343, 0
  %v392 = vsel %vm148, %v344, 0
  %v395 = vsel %vm148, %v345, 0
  %v398 = vsel %vm148, %v346, 0
  %v401 = vsel %vm148, %v347, 0
  %v404 = vsel %vm148, %v348, 0
  %v407 = vsel %vm148, %v349, 0
  %409 = vmatprep.subr.bf16.mxu0 0
  %410 = vmatpush1.bf16.msra.mxu0 %v369
  %411 = vmatprep.subr.bf16.mxu0 0
  %412 = vmatpush1.bf16.msra.mxu0 %v370
  %413 = vmatprep.subr.bf16.mxu0 0
  %414 = vmatpush1.bf16.msra.mxu0 0
  %415 = vmatprep.subr.bf16.mxu0 0
  %416 = vmatpush1.bf16.msra.mxu0 0
  %417 = vmatprep.subr.bf16.mxu0 0
  %418 = vmatpush1.bf16.msra.mxu0 0
  %419 = vmatprep.subr.bf16.mxu0 0
  %420 = vmatpush1.bf16.msra.mxu0 0
  %421 = vmatprep.subr.bf16.mxu0 0
  %422 = vmatpush1.bf16.msra.mxu0 0
  %423 = vmatprep.subr.bf16.mxu0 0
  %424 = vmatpush1.bf16.msra.mxu0 0
  %425 = vmatprep.subr.bf16.mxu0 0
  %426 = vmatpush1.bf16.msra.mxu0 0
  %427 = vmatprep.subr.bf16.mxu0 0
  %428 = vmatpush1.bf16.msra.mxu0 0
  %429 = vmatprep.subr.bf16.mxu0 0
  %430 = vmatpush1.bf16.msra.mxu0 0
  %431 = vmatprep.subr.bf16.mxu0 0
  %432 = vmatpush1.bf16.msra.mxu0 0
  %433 = vmatprep.subr.bf16.mxu0 0
  %434 = vmatpush1.bf16.msra.mxu0 0
  %435 = vmatprep.subr.bf16.mxu0 0
  %436 = vmatpush1.bf16.msra.mxu0 0
  %437 = vmatprep.subr.bf16.mxu0 0
  %438 = vmatpush1.bf16.msra.mxu0 0
  %439 = vmatprep.subr.bf16.mxu0 0
  %440 = vmatpush1.bf16.msra.mxu0 0
  %441 = vmatprep.mubr.bf16.mxu0 0
  %442 = vmatmul.mubr.bf16.gmra.mrb[0].mxu0 %v374
  %v443 = vpop.f32.mrb[0].mxu0
  %v444 = vadd.f32 %v359, %v443
  %v445 = vpop.f32.mrb[0].mxu0
  %v446 = vpop.f32.mrb[0].mxu0
  %v447 = vadd.f32 %v359, %v446
  %v448 = vpop.f32.mrb[0].mxu0
  %449 = vmatprep.mubr.bf16.mxu0 0
  %450 = vmatmul.mubr.bf16.gmra.mrb[0].mxu0 %v377
  %v451 = vpop.f32.mrb[0].mxu0
  %v452 = vadd.f32 %v359, %v451
  %v453 = vpop.f32.mrb[0].mxu0
  %v454 = vpop.f32.mrb[0].mxu0
  %v455 = vadd.f32 %v359, %v454
  %v456 = vpop.f32.mrb[0].mxu0
  %457 = vmatprep.mubr.bf16.mxu0 0
  %458 = vmatmul.mubr.bf16.gmra.mrb[0].mxu0 %v380
  %v459 = vpop.f32.mrb[0].mxu0
  %v460 = vadd.f32 %v359, %v459
  %v461 = vpop.f32.mrb[0].mxu0
  %v462 = vpop.f32.mrb[0].mxu0
  %v463 = vadd.f32 %v359, %v462
  %v464 = vpop.f32.mrb[0].mxu0
  %465 = vmatprep.mubr.bf16.mxu0 0
  %466 = vmatmul.mubr.bf16.gmra.mrb[0].mxu0 %v383
  %v467 = vpop.f32.mrb[0].mxu0
  %v468 = vadd.f32 %v359, %v467
  %v469 = vpop.f32.mrb[0].mxu0
  %v470 = vpop.f32.mrb[0].mxu0
  %v471 = vadd.f32 %v359, %v470
  %v472 = vpop.f32.mrb[0].mxu0
  %473 = vmatprep.mubr.bf16.mxu0 0
  %474 = vmatmul.mubr.bf16.gmra.mrb[0].mxu0 %v386
  %v475 = vpop.f32.mrb[0].mxu0
  %v476 = vadd.f32 %v359, %v475
  %v477 = vpop.f32.mrb[0].mxu0
  %v478 = vpop.f32.mrb[0].mxu0
  %v479 = vadd.f32 %v359, %v478
  %v480 = vpop.f32.mrb[0].mxu0
  %481 = vmatprep.mubr.bf16.mxu0 0
  %482 = vmatmul.mubr.bf16.gmra.mrb[0].mxu0 %v389
  %v483 = vpop.f32.mrb[0].mxu0
  %v484 = vadd.f32 %v359, %v483
  %v485 = vpop.f32.mrb[0].mxu0
  %v486 = vpop.f32.mrb[0].mxu0
  %v487 = vadd.f32 %v359, %v486
  %v488 = vpop.f32.mrb[0].mxu0
  %489 = vmatprep.mubr.bf16.mxu0 0
  %490 = vmatmul.mubr.bf16.gmra.mrb[0].mxu0 %v392
  %v491 = vpop.f32.mrb[0].mxu0
  %v492 = vadd.f32 %v359, %v491
  %v493 = vpop.f32.mrb[0].mxu0
  %v494 = vpop.f32.mrb[0].mxu0
  %v495 = vadd.f32 %v359, %v494
  %v496 = vpop.f32.mrb[0].mxu0
  %497 = vmatprep.mubr.bf16.mxu0 0
  %498 = vmatmul.mubr.bf16.gmra.mrb[0].mxu0 %v395
  %v499 = vpop.f32.mrb[0].mxu0
  %v500 = vadd.f32 %v359, %v499
  %v501 = vpop.f32.mrb[0].mxu0
  %v502 = vpop.f32.mrb[0].mxu0
  %v503 = vadd.f32 %v359, %v502
  %v504 = vpop.f32.mrb[0].mxu0
  %505 = vmatprep.mubr.bf16.mxu0 0
  %506 = vmatmul.mubr.bf16.gmra.mrb[0].mxu0 %v398
  %v507 = vpop.f32.mrb[0].mxu0
  %v508 = vadd.f32 %v359, %v507
  %v509 = vpop.f32.mrb[0].mxu0
  %v510 = vpop.f32.mrb[0].mxu0
  %v511 = vadd.f32 %v359, %v510
  %v512 = vpop.f32.mrb[0].mxu0
  %513 = vmatprep.mubr.bf16.mxu0 0
  %514 = vmatmul.mubr.bf16.gmra.mrb[0].mxu0 %v401
  %v515 = vpop.f32.mrb[0].mxu0
  %v516 = vadd.f32 %v359, %v515
  %v517 = vpop.f32.mrb[0].mxu0
  %v518 = vpop.f32.mrb[0].mxu0
  %v519 = vadd.f32 %v359, %v518
  %v520 = vpop.f32.mrb[0].mxu0
  %521 = vmatprep.mubr.bf16.mxu0 0
  %522 = vmatmul.mubr.bf16.gmra.mrb[0].mxu0 %v404
  %v523 = vpop.f32.mrb[0].mxu0
  %v524 = vadd.f32 %v359, %v523
  %v525 = vpop.f32.mrb[0].mxu0
  %v526 = vpop.f32.mrb[0].mxu0
  %v527 = vadd.f32 %v359, %v526
  %v528 = vpop.f32.mrb[0].mxu0
  %529 = vmatprep.mubr.bf16.mxu0 0
  %530 = vmatmul.mubr.bf16.gmra.mrb[0].mxu0 %v407
  %v531 = vpop.f32.mrb[0].mxu0
  %v532 = vadd.f32 %v359, %v531
  %v533 = vpop.f32.mrb[0].mxu0
  %v534 = vpop.f32.mrb[0].mxu0
  %v535 = vadd.f32 %v359, %v534
  %v536 = vpop.f32.mrb[0].mxu0
  %537 = vdwg.mxu0
  %v538 = vpack.c.bf16 %v447, %v444
  %v539 = vpack.c.bf16 %v452, %v452
  %v542 = vunpack.c.l.b16 %v538
  %v543 = vunpack.c.h.b16 %v538
  %v544 = vunpack.c.l.b16 %v539
  %v545 = vpack.c.b16 %v542, %v542
  %v546 = vpack.c.b16 %v543, %v543
  %v547 = vpack.c.b16 %v544, %v544
  %vm551 = vcmask 781312
  %552 = vst.msk [vmem:[#allocation2] sm:$0xf] %vm551, %v545
  %553 = vst.msk [vmem:[#allocation2 + $0x4] sm:$0xf] %vm551, %v546
  %554 = vst.msk [vmem:[#allocation2 + $0x8] sm:$0xf] %vm551, %v547
  %v555 = vpack.c.bf16 %v460, %v455
  %v556 = vpack.c.bf16 %v463, %v463
  %v559 = vunpack.c.l.b16 %v555
  %v560 = vunpack.c.h.b16 %v555
  %v561 = vunpack.c.l.b16 %v556
  %v562 = vpack.c.b16 %v559, %v559
  %v563 = vpack.c.b16 %v560, %v560
  %v564 = vpack.c.b16 %v561, %v561
  %s568 = scalar_lea.vmem [#allocation2], 12
  %569 = vst.msk [vmem:[%s568] sm:$0xf] %vm551, %v562
  %570 = vst.msk [vmem:[%s568 + $0x4] sm:$0xf] %vm551, %v563
  %571 = vst.msk [vmem:[%s568 + $0x8] sm:$0xf] %vm551, %v564
  %v572 = vpack.c.bf16 %v471, %v468
  %v573 = vpack.c.bf16 %v476, %v476
  %v576 = vunpack.c.l.b16 %v572
  %v577 = vunpack.c.h.b16 %v572
  %v578 = vunpack.c.l.b16 %v573
  %v579 = vpack.c.b16 %v576, %v576
  %v580 = vpack.c.b16 %v577, %v577
  %v581 = vpack.c.b16 %v578, %v578
  %s585 = scalar_lea.vmem [#allocation2], 24
  %586 = vst.msk [vmem:[%s585] sm:$0xf] %vm551, %v579
  %587 = vst.msk [vmem:[%s585 + $0x4] sm:$0xf] %vm551, %v580
  %588 = vst.msk [vmem:[%s585 + $0x8] sm:$0xf] %vm551, %v581
  %v589 = vpack.c.bf16 %v484, %v479
  %v590 = vpack.c.bf16 %v487, %v487
  %v593 = vunpack.c.l.b16 %v589
  %v594 = vunpack.c.h.b16 %v589
  %v595 = vunpack.c.l.b16 %v590
  %v596 = vpack.c.b16 %v593, %v593
  %v597 = vpack.c.b16 %v594, %v594
  %v598 = vpack.c.b16 %v595, %v595
  %s602 = scalar_lea.vmem [#allocation2], 36
  %603 = vst.msk [vmem:[%s602] sm:$0xf] %vm551, %v596
  %604 = vst.msk [vmem:[%s602 + $0x4] sm:$0xf] %vm551, %v597
  %605 = vst.msk [vmem:[%s602 + $0x8] sm:$0xf] %vm551, %v598
  %v606 = vpack.c.bf16 %v495, %v492
  %v607 = vpack.c.bf16 %v500, %v500
  %v610 = vunpack.c.l.b16 %v606
  %v611 = vunpack.c.h.b16 %v606
  %v612 = vunpack.c.l.b16 %v607
  %v613 = vpack.c.b16 %v610, %v610
  %v614 = vpack.c.b16 %v611, %v611
  %v615 = vpack.c.b16 %v612, %v612
  %s619 = scalar_lea.vmem [#allocation2], 48
  %620 = vst.msk [vmem:[%s619] sm:$0xf] %vm551, %v613
  %621 = vst.msk [vmem:[%s619 + $0x4] sm:$0xf] %vm551, %v614
  %622 = vst.msk [vmem:[%s619 + $0x8] sm:$0xf] %vm551, %v615
  %v623 = vpack.c.bf16 %v508, %v503
  %v624 = vpack.c.bf16 %v511, %v511
  %v627 = vunpack.c.l.b16 %v623
  %v628 = vunpack.c.h.b16 %v623
  %v629 = vunpack.c.l.b16 %v624
  %v630 = vpack.c.b16 %v627, %v627
  %v631 = vpack.c.b16 %v628, %v628
  %v632 = vpack.c.b16 %v629, %v629
  %s636 = scalar_lea.vmem [#allocation2], 60
  %637 = vst.msk [vmem:[%s636] sm:$0xf] %vm551, %v630
  %638 = vst.msk [vmem:[%s636 + $0x4] sm:$0xf] %vm551, %v631
  %639 = vst.msk [vmem:[%s636 + $0x8] sm:$0xf] %vm551, %v632
  %v640 = vpack.c.bf16 %v519, %v516
  %v641 = vpack.c.bf16 %v524, %v524
  %v644 = vunpack.c.l.b16 %v640
  %v645 = vunpack.c.h.b16 %v640
  %v646 = vunpack.c.l.b16 %v641
  %v647 = vpack.c.b16 %v644, %v644
  %v648 = vpack.c.b16 %v645, %v645
  %v649 = vpack.c.b16 %v646, %v646
  %s653 = scalar_lea.vmem [#allocation2], 72
  %654 = vst.msk [vmem:[%s653] sm:$0xf] %vm551, %v647
  %655 = vst.msk [vmem:[%s653 + $0x4] sm:$0xf] %vm551, %v648
  %656 = vst.msk [vmem:[%s653 + $0x8] sm:$0xf] %vm551, %v649
  %v657 = vpack.c.bf16 %v532, %v527
  %v658 = vpack.c.bf16 %v535, %v535
  %v661 = vunpack.c.l.b16 %v657
  %v662 = vunpack.c.h.b16 %v657
  %v663 = vunpack.c.l.b16 %v658
  %v664 = vpack.c.b16 %v661, %v661
  %v665 = vpack.c.b16 %v662, %v662
  %v666 = vpack.c.b16 %v663, %v663
  %s670 = scalar_lea.vmem [#allocation2], 84
  %671 = vst.msk [vmem:[%s670] sm:$0xf] %vm551, %v664
  %672 = vst.msk [vmem:[%s670 + $0x4] sm:$0xf] %vm551, %v665
  %673 = vst.msk [vmem:[%s670 + $0x8] sm:$0xf] %vm551, %v666
  %v674 = vld [vmem:[#allocation2] sm:$0xf]
  %v675 = vld [vmem:[#allocation2 + $0x4] sm:$0xf]
  %v676 = vld [vmem:[#allocation2 + $0x8] sm:$0xf]
  %v677 = vunpack.c.l.bf16 %v674
  %v678 = vunpack.c.l.bf16 %v675
  %v679 = vunpack.c.l.bf16 %v676
  %v680 = vld [vmem:[%s5] sm:$0xf]
  %v681 = vld [vmem:[%s5 + $0x4] sm:$0xf]
  %v682 = vld [vmem:[%s5 + $0x8] sm:$0xf]
  %v683 = vld [vmem:[%s5 + $0xc] sm:$0xf]
  %v684 = vld [vmem:[%s6] sm:$0x1]
  %v686 = vlaneseq
  %v687 = vshrl.u32 %v686, 7
  %v688 = vsub.s32 0, %v687
  %v689 = vrot.slane %v684, %v688
  %v695 = vunpack.c.l.b16 %v680
  %v696 = vunpack.c.l.b16 %v681
  %v697 = vunpack.c.l.b16 %v682
  %v698 = vunpack.c.l.b16 %v683
  %v699 = vpack.c.b16 %v696, %v695
  %v700 = vpack.c.b16 %v698, %v697
  %v704 = vsel %vm148, 0, 0
  %706 = vmatprep.subr.bf16.mxu0 0
  %707 = vmatpush1.bf16.msra.mxu0 %v699
  %708 = vmatprep.subr.bf16.mxu0 0
  %709 = vmatpush1.bf16.msra.mxu0 %v700
  %710 = vmatprep.subr.bf16.mxu0 0
  %711 = vmatpush1.bf16.msra.mxu0 0
  %712 = vmatprep.subr.bf16.mxu0 0
  %713 = vmatpush1.bf16.msra.mxu0 0
  %714 = vmatprep.subr.bf16.mxu0 0
  %715 = vmatpush1.bf16.msra.mxu0 0
  %716 = vmatprep.subr.bf16.mxu0 0
  %717 = vmatpush1.bf16.msra.mxu0 0
  %718 = vmatprep.subr.bf16.mxu0 0
  %719 = vmatpush1.bf16.msra.mxu0 0
  %720 = vmatprep.subr.bf16.mxu0 0
  %721 = vmatpush1.bf16.msra.mxu0 0
  %722 = vmatprep.subr.bf16.mxu0 0
  %723 = vmatpush1.bf16.msra.mxu0 0
  %724 = vmatprep.subr.bf16.mxu0 0
  %725 = vmatpush1.bf16.msra.mxu0 0
  %726 = vmatprep.subr.bf16.mxu0 0
  %727 = vmatpush1.bf16.msra.mxu0 0
  %728 = vmatprep.subr.bf16.mxu0 0
  %729 = vmatpush1.bf16.msra.mxu0 0
  %730 = vmatprep.subr.bf16.mxu0 0
  %731 = vmatpush1.bf16.msra.mxu0 0
  %732 = vmatprep.subr.bf16.mxu0 0
  %733 = vmatpush1.bf16.msra.mxu0 0
  %734 = vmatprep.subr.bf16.mxu0 0
  %735 = vmatpush1.bf16.msra.mxu0 0
  %736 = vmatprep.subr.bf16.mxu0 0
  %737 = vmatpush1.bf16.msra.mxu0 0
  %738 = vmatprep.mubr.bf16.mxu0 0
  %739 = vmatmul.mubr.bf16.gmra.mrb[0].mxu0 %v704
  %v740 = vpop.f32.mrb[0].mxu0
  %v741 = vadd.f32 %v689, %v740
  %v742 = vpop.f32.mrb[0].mxu0
  %v743 = vpop.f32.mrb[0].mxu0
  %v744 = vadd.f32 %v689, %v743
  %v745 = vpop.f32.mrb[0].mxu0
  %746 = vmatprep.mubr.bf16.mxu0 0
  %747 = vmatmul.mubr.bf16.gmra.mrb[0].mxu0 %v704
  %v748 = vpop.f32.mrb[0].mxu0
  %v749 = vadd.f32 %v689, %v748
  %v750 = vpop.f32.mrb[0].mxu0
  %v751 = vpop.f32.mrb[0].mxu0
  %v752 = vpop.f32.mrb[0].mxu0
  %753 = vdwg.mxu0
  %v754 = vadd.f32 %v677, %v741
  %v755 = vadd.f32 %v678, %v744
  %v756 = vadd.f32 %v679, %v749
  %v757 = vxor.u32 %v754, 2147483648
  %v758 = vxor.u32 %v755, 2147483648
  %v759 = vxor.u32 %v756, 2147483648
  %v760 = vmul.f32 %v757, 1.442695
  %v761 = vpow.pop %v760
  %v762 = vmul.f32 %v758, 1.442695
  %v763 = vpow.pop %v762
  %v764 = vmul.f32 %v759, 1.442695
  %v765 = vpow.pop %v764
  %v766 = vadd.f32 %v761, 1.0
  %v767 = vadd.f32 %v763, 1.0
  %v768 = vadd.f32 %v765, 1.0
  %v769 = vrcp.pop %v766
  %v770 = vmul.f32 1.0, %v769
  %v771 = vrcp.pop %v767
  %v772 = vmul.f32 1.0, %v771
  %v773 = vrcp.pop %v768
  %v774 = vmul.f32 1.0, %v773
  %778 = vrot.lane.b32.xlu0 %v741, 64
  %v779 = vpop.permute.xlu0 %778
  %780 = vrot.lane.b32.xlu0 %v744, 64
  %v781 = vpop.permute.xlu0 %780
  %782 = vrot.lane.b32.xlu0 %v749, 64
  %v783 = vpop.permute.xlu0 %782
  %v787 = vmul.f32 %v770, %v779
  %v788 = vmul.f32 %v772, %v781
  %v789 = vmul.f32 %v774, %v783
  %793 = vrot.lane.b32.xlu0 %v787, 64
  %v794 = vpop.permute.xlu0 %793
  %795 = vrot.lane.b32.xlu0 %v788, 64
  %v796 = vpop.permute.xlu0 %795
  %797 = vrot.lane.b32.xlu0 %v789, 64
  %v798 = vpop.permute.xlu0 %797
  %v802 = vadd.f32 %v677, %v794
  %v803 = vadd.f32 %v678, %v796
  %v804 = vadd.f32 %v679, %v798
  %v805 = vtanh.pop %v802
  %v806 = vtanh.pop %v803
  %v807 = vtanh.pop %v804
  %v808 = vsub.f32 1.0, %v770
  %v809 = vsub.f32 1.0, %v772
  %v810 = vsub.f32 1.0, %v774
  %814 = vrot.lane.b32.xlu0 %v805, 96
  %v815 = vpop.permute.xlu0 %814
  %816 = vrot.lane.b32.xlu0 %v806, 96
  %v817 = vpop.permute.xlu0 %816
  %818 = vrot.lane.b32.xlu0 %v807, 96
  %v819 = vpop.permute.xlu0 %818
  %v823 = vmul.f32 %v808, %v815
  %v824 = vmul.f32 %v809, %v817
  %v825 = vmul.f32 %v810, %v819
  %v826 = vmul.f32 %v770, 0.0
  %v827 = vmul.f32 %v772, 0.0
  %v828 = vmul.f32 %v774, 0.0
  %v829 = vadd.f32 %v823, %v826
  %v830 = vadd.f32 %v824, %v827
  %v831 = vadd.f32 %v825, %v828
  %v832 = vld [vmem:[%s568] sm:$0xf]
  %v833 = vld [vmem:[%s568 + $0x4] sm:$0xf]
  %v834 = vld [vmem:[%s568 + $0x8] sm:$0xf]
  %v835 = vunpack.c.l.bf16 %v832
  %v836 = vunpack.c.l.bf16 %v833
  %v837 = vunpack.c.l.bf16 %v834
  %v838 = vpack.c.bf16 %v830, %v829
  %v839 = vpack.c.bf16 %v831, %v831
  %842 = vrot.lane.b32.xlu0 %v838, 96
  %v843 = vpop.permute.xlu0 %842
  %844 = vrot.lane.b32.xlu0 %v839, 96
  %v845 = vpop.permute.xlu0 %844
  %v847 = vsel %vm148, %v843, 0
  %v850 = vsel %vm148, %v845, 0
  %852 = vmatprep.subr.bf16.mxu0 0
  %853 = vmatpush1.bf16.msra.mxu0 %v699
  %854 = vmatprep.subr.bf16.mxu0 0
  %855 = vmatpush1.bf16.msra.mxu0 %v700
  %856 = vmatprep.subr.bf16.mxu0 0
  %857 = vmatpush1.bf16.msra.mxu0 0
  %858 = vmatprep.subr.bf16.mxu0 0
  %859 = vmatpush1.bf16.msra.mxu0 0
  %860 = vmatprep.subr.bf16.mxu0 0
  %861 = vmatpush1.bf16.msra.mxu0 0
  %862 = vmatprep.subr.bf16.mxu0 0
  %863 = vmatpush1.bf16.msra.mxu0 0
  %864 = vmatprep.subr.bf16.mxu0 0
  %865 = vmatpush1.bf16.msra.mxu0 0
  %866 = vmatprep.subr.bf16.mxu0 0
  %867 = vmatpush1.bf16.msra.mxu0 0
  %868 = vmatprep.subr.bf16.mxu0 0
  %869 = vmatpush1.bf16.msra.mxu0 0
  %870 = vmatprep.subr.bf16.mxu0 0
  %871 = vmatpush1.bf16.msra.mxu0 0
  %872 = vmatprep.subr.bf16.mxu0 0
  %873 = vmatpush1.bf16.msra.mxu0 0
  %874 = vmatprep.subr.bf16.mxu0 0
  %875 = vmatpush1.bf16.msra.mxu0 0
  %876 = vmatprep.subr.bf16.mxu0 0
  %877 = vmatpush1.bf16.msra.mxu0 0
  %878 = vmatprep.subr.bf16.mxu0 0
  %879 = vmatpush1.bf16.msra.mxu0 0
  %880 = vmatprep.subr.bf16.mxu0 0
  %881 = vmatpush1.bf16.msra.mxu0 0
  %882 = vmatprep.subr.bf16.mxu0 0
  %883 = vmatpush1.bf16.msra.mxu0 0
  %884 = vmatprep.mubr.bf16.mxu0 0
  %885 = vmatmul.mubr.bf16.gmra.mrb[0].mxu0 %v847
  %v886 = vpop.f32.mrb[0].mxu0
  %v887 = vadd.f32 %v689, %v886
  %v888 = vpop.f32.mrb[0].mxu0
  %v889 = vpop.f32.mrb[0].mxu0
  %v890 = vadd.f32 %v689, %v889
  %v891 = vpop.f32.mrb[0].mxu0
  %892 = vmatprep.mubr.bf16.mxu0 0
  %893 = vmatmul.mubr.bf16.gmra.mrb[0].mxu0 %v850
  %v894 = vpop.f32.mrb[0].mxu0
  %v895 = vadd.f32 %v689, %v894
  %v896 = vpop.f32.mrb[0].mxu0
  %v897 = vpop.f32.mrb[0].mxu0
  %v898 = vpop.f32.mrb[0].mxu0
  %899 = vdwg.mxu0
  %v900 = vadd.f32 %v835, %v887
  %v901 = vadd.f32 %v836, %v890
  %v902 = vadd.f32 %v837, %v895
  %v903 = vxor.u32 %v900, 2147483648
  %v904 = vxor.u32 %v901, 2147483648
  %v905 = vxor.u32 %v902, 2147483648
  %v906 = vmul.f32 %v903, 1.442695
  %v907 = vpow.pop %v906
  %v908 = vmul.f32 %v904, 1.442695
  %v909 = vpow.pop %v908
  %v910 = vmul.f32 %v905, 1.442695
  %v911 = vpow.pop %v910
  %v912 = vadd.f32 %v907, 1.0
  %v913 = vadd.f32 %v909, 1.0
  %v914 = vadd.f32 %v911, 1.0
  %v915 = vrcp.pop %v912
  %v916 = vmul.f32 1.0, %v915
  %v917 = vrcp.pop %v913
  %v918 = vmul.f32 1.0, %v917
  %v919 = vrcp.pop %v914
  %v920 = vmul.f32 1.0, %v919
  %924 = vrot.lane.b32.xlu0 %v887, 64
  %v925 = vpop.permute.xlu0 %924
  %926 = vrot.lane.b32.xlu0 %v890, 64
  %v927 = vpop.permute.xlu0 %926
  %928 = vrot.lane.b32.xlu0 %v895, 64
  %v929 = vpop.permute.xlu0 %928
  %v933 = vmul.f32 %v916, %v925
  %v934 = vmul.f32 %v918, %v927
  %v935 = vmul.f32 %v920, %v929
  %939 = vrot.lane.b32.xlu0 %v933, 64
  %v940 = vpop.permute.xlu0 %939
  %941 = vrot.lane.b32.xlu0 %v934, 64
  %v942 = vpop.permute.xlu0 %941
  %943 = vrot.lane.b32.xlu0 %v935, 64
  %v944 = vpop.permute.xlu0 %943
  %v948 = vadd.f32 %v835, %v940
  %v949 = vadd.f32 %v836, %v942
  %v950 = vadd.f32 %v837, %v944
  %v951 = vtanh.pop %v948
  %v952 = vtanh.pop %v949
  %v953 = vtanh.pop %v950
  %v954 = vsub.f32 1.0, %v916
  %v955 = vsub.f32 1.0, %v918
  %v956 = vsub.f32 1.0, %v920
  %960 = vrot.lane.b32.xlu0 %v951, 96
  %v961 = vpop.permute.xlu0 %960
  %962 = vrot.lane.b32.xlu0 %v952, 96
  %v963 = vpop.permute.xlu0 %962
  %964 = vrot.lane.b32.xlu0 %v953, 96
  %v965 = vpop.permute.xlu0 %964
  %v969 = vmul.f32 %v954, %v961
  %v970 = vmul.f32 %v955, %v963
  %v971 = vmul.f32 %v956, %v965
  %v972 = vmul.f32 %v916, %v829
  %v973 = vmul.f32 %v918, %v830
  %v974 = vmul.f32 %v920, %v831
  %v975 = vadd.f32 %v969, %v972
  %v976 = vadd.f32 %v970, %v973
  %v977 = vadd.f32 %v971, %v974
  %v978 = vld [vmem:[%s585] sm:$0xf]
  %v979 = vld [vmem:[%s585 + $0x4] sm:$0xf]
  %v980 = vld [vmem:[%s585 + $0x8] sm:$0xf]
  %v981 = vunpack.c.l.bf16 %v978
  %v982 = vunpack.c.l.bf16 %v979
  %v983 = vunpack.c.l.bf16 %v980
  %v984 = vpack.c.bf16 %v976, %v975
  %v985 = vpack.c.bf16 %v977, %v977
  %988 = vrot.lane.b32.xlu0 %v984, 96
  %v989 = vpop.permute.xlu0 %988
  %990 = vrot.lane.b32.xlu0 %v985, 96
  %v991 = vpop.permute.xlu0 %990
  %v993 = vsel %vm148, %v989, 0
  %v996 = vsel %vm148, %v991, 0
  %998 = vmatprep.subr.bf16.mxu0 0
  %999 = vmatpush1.bf16.msra.mxu0 %v699
  %1000 = vmatprep.subr.bf16.mxu0 0
  %1001 = vmatpush1.bf16.msra.mxu0 %v700
  %1002 = vmatprep.subr.bf16.mxu0 0
  %1003 = vmatpush1.bf16.msra.mxu0 0
  %1004 = vmatprep.subr.bf16.mxu0 0
  %1005 = vmatpush1.bf16.msra.mxu0 0
  %1006 = vmatprep.subr.bf16.mxu0 0
  %1007 = vmatpush1.bf16.msra.mxu0 0
  %1008 = vmatprep.subr.bf16.mxu0 0
  %1009 = vmatpush1.bf16.msra.mxu0 0
  %1010 = vmatprep.subr.bf16.mxu0 0
  %1011 = vmatpush1.bf16.msra.mxu0 0
  %1012 = vmatprep.subr.bf16.mxu0 0
  %1013 = vmatpush1.bf16.msra.mxu0 0
  %1014 = vmatprep.subr.bf16.mxu0 0
  %1015 = vmatpush1.bf16.msra.mxu0 0
  %1016 = vmatprep.subr.bf16.mxu0 0
  %1017 = vmatpush1.bf16.msra.mxu0 0
  %1018 = vmatprep.subr.bf16.mxu0 0
  %1019 = vmatpush1.bf16.msra.mxu0 0
  %1020 = vmatprep.subr.bf16.mxu0 0
  %1021 = vmatpush1.bf16.msra.mxu0 0
  %1022 = vmatprep.subr.bf16.mxu0 0
  %1023 = vmatpush1.bf16.msra.mxu0 0
  %1024 = vmatprep.subr.bf16.mxu0 0
  %1025 = vmatpush1.bf16.msra.mxu0 0
  %1026 = vmatprep.subr.bf16.mxu0 0
  %1027 = vmatpush1.bf16.msra.mxu0 0
  %1028 = vmatprep.subr.bf16.mxu0 0
  %1029 = vmatpush1.bf16.msra.mxu0 0
  %1030 = vmatprep.mubr.bf16.mxu0 0
  %1031 = vmatmul.mubr.bf16.gmra.mrb[0].mxu0 %v993
  %v1032 = vpop.f32.mrb[0].mxu0
  %v1033 = vadd.f32 %v689, %v1032
  %v1034 = vpop.f32.mrb[0].mxu0
  %v1035 = vpop.f32.mrb[0].mxu0
  %v1036 = vadd.f32 %v689, %v1035
  %v1037 = vpop.f32.mrb[0].mxu0
  %1038 = vmatprep.mubr.bf16.mxu0 0
  %1039 = vmatmul.mubr.bf16.gmra.mrb[0].mxu0 %v996
  %v1040 = vpop.f32.mrb[0].mxu0
  %v1041 = vadd.f32 %v689, %v1040
  %v1042 = vpop.f32.mrb[0].mxu0
  %v1043 = vpop.f32.mrb[0].mxu0
  %v1044 = vpop.f32.mrb[0].mxu0
  %1045 = vdwg.mxu0
  %v1046 = vadd.f32 %v981, %v1033
  %v1047 = vadd.f32 %v982, %v1036
  %v1048 = vadd.f32 %v983, %v1041
  %v1049 = vxor.u32 %v1046, 2147483648
  %v1050 = vxor.u32 %v1047, 2147483648
  %v1051 = vxor.u32 %v1048, 2147483648
  %v1052 = vmul.f32 %v1049, 1.442695
  %v1053 = vpow.pop %v1052
  %v1054 = vmul.f32 %v1050, 1.442695
  %v1055 = vpow.pop %v1054
  %v1056 = vmul.f32 %v1051, 1.442695
  %v1057 = vpow.pop %v1056
  %v1058 = vadd.f32 %v1053, 1.0
  %v1059 = vadd.f32 %v1055, 1.0
  %v1060 = vadd.f32 %v1057, 1.0
  %v1061 = vrcp.pop %v1058
  %v1062 = vmul.f32 1.0, %v1061
  %v1063 = vrcp.pop %v1059
  %v1064 = vmul.f32 1.0, %v1063
  %v1065 = vrcp.pop %v1060
  %v1066 = vmul.f32 1.0, %v1065
  %1070 = vrot.lane.b32.xlu0 %v1033, 64
  %v1071 = vpop.permute.xlu0 %1070
  %1072 = vrot.lane.b32.xlu0 %v1036, 64
  %v1073 = vpop.permute.xlu0 %1072
  %1074 = vrot.lane.b32.xlu0 %v1041, 64
  %v1075 = vpop.permute.xlu0 %1074
  %v1079 = vmul.f32 %v1062, %v1071
  %v1080 = vmul.f32 %v1064, %v1073
  %v1081 = vmul.f32 %v1066, %v1075
  %1085 = vrot.lane.b32.xlu0 %v1079, 64
  %v1086 = vpop.permute.xlu0 %1085
  %1087 = vrot.lane.b32.xlu0 %v1080, 64
  %v1088 = vpop.permute.xlu0 %1087
  %1089 = vrot.lane.b32.xlu0 %v1081, 64
  %v1090 = vpop.permute.xlu0 %1089
  %v1094 = vadd.f32 %v981, %v1086
  %v1095 = vadd.f32 %v982, %v1088
  %v1096 = vadd.f32 %v983, %v1090
  %v1097 = vtanh.pop %v1094
  %v1098 = vtanh.pop %v1095
  %v1099 = vtanh.pop %v1096
  %v1100 = vsub.f32 1.0, %v1062
  %v1101 = vsub.f32 1.0, %v1064
  %v1102 = vsub.f32 1.0, %v1066
  %1106 = vrot.lane.b32.xlu0 %v1097, 96
  %v1107 = vpop.permute.xlu0 %1106
  %1108 = vrot.lane.b32.xlu0 %v1098, 96
  %v1109 = vpop.permute.xlu0 %1108
  %1110 = vrot.lane.b32.xlu0 %v1099, 96
  %v1111 = vpop.permute.xlu0 %1110
  %v1115 = vmul.f32 %v1100, %v1107
  %v1116 = vmul.f32 %v1101, %v1109
  %v1117 = vmul.f32 %v1102, %v1111
  %v1118 = vmul.f32 %v1062, %v975
  %v1119 = vmul.f32 %v1064, %v976
  %v1120 = vmul.f32 %v1066, %v977
  %v1121 = vadd.f32 %v1115, %v1118
  %v1122 = vadd.f32 %v1116, %v1119
  %v1123 = vadd.f32 %v1117, %v1120
  %v1124 = vld [vmem:[%s602] sm:$0xf]
  %v1125 = vld [vmem:[%s602 + $0x4] sm:$0xf]
  %v1126 = vld [vmem:[%s602 + $0x8] sm:$0xf]
  %v1127 = vunpack.c.l.bf16 %v1124
  %v1128 = vunpack.c.l.bf16 %v1125
  %v1129 = vunpack.c.l.bf16 %v1126
  %v1130 = vpack.c.bf16 %v1122, %v1121
  %v1131 = vpack.c.bf16 %v1123, %v1123
  %1134 = vrot.lane.b32.xlu0 %v1130, 96
  %v1135 = vpop.permute.xlu0 %1134
  %1136 = vrot.lane.b32.xlu0 %v1131, 96
  %v1137 = vpop.permute.xlu0 %1136
  %v1139 = vsel %vm148, %v1135, 0
  %v1142 = vsel %vm148, %v1137, 0
  %1144 = vmatprep.subr.bf16.mxu0 0
  %1145 = vmatpush1.bf16.msra.mxu0 %v699
  %1146 = vmatprep.subr.bf16.mxu0 0
  %1147 = vmatpush1.bf16.msra.mxu0 %v700
  %1148 = vmatprep.subr.bf16.mxu0 0
  %1149 = vmatpush1.bf16.msra.mxu0 0
  %1150 = vmatprep.subr.bf16.mxu0 0
  %1151 = vmatpush1.bf16.msra.mxu0 0
  %1152 = vmatprep.subr.bf16.mxu0 0
  %1153 = vmatpush1.bf16.msra.mxu0 0
  %1154 = vmatprep.subr.bf16.mxu0 0
  %1155 = vmatpush1.bf16.msra.mxu0 0
  %1156 = vmatprep.subr.bf16.mxu0 0
  %1157 = vmatpush1.bf16.msra.mxu0 0
  %1158 = vmatprep.subr.bf16.mxu0 0
  %1159 = vmatpush1.bf16.msra.mxu0 0
  %1160 = vmatprep.subr.bf16.mxu0 0
  %1161 = vmatpush1.bf16.msra.mxu0 0
  %1162 = vmatprep.subr.bf16.mxu0 0
  %1163 = vmatpush1.bf16.msra.mxu0 0
  %1164 = vmatprep.subr.bf16.mxu0 0
  %1165 = vmatpush1.bf16.msra.mxu0 0
  %1166 = vmatprep.subr.bf16.mxu0 0
  %1167 = vmatpush1.bf16.msra.mxu0 0
  %1168 = vmatprep.subr.bf16.mxu0 0
  %1169 = vmatpush1.bf16.msra.mxu0 0
  %1170 = vmatprep.subr.bf16.mxu0 0
  %1171 = vmatpush1.bf16.msra.mxu0 0
  %1172 = vmatprep.subr.bf16.mxu0 0
  %1173 = vmatpush1.bf16.msra.mxu0 0
  %1174 = vmatprep.subr.bf16.mxu0 0
  %1175 = vmatpush1.bf16.msra.mxu0 0
  %1176 = vmatprep.mubr.bf16.mxu0 0
  %1177 = vmatmul.mubr.bf16.gmra.mrb[0].mxu0 %v1139
  %v1178 = vpop.f32.mrb[0].mxu0
  %v1179 = vadd.f32 %v689, %v1178
  %v1180 = vpop.f32.mrb[0].mxu0
  %v1181 = vpop.f32.mrb[0].mxu0
  %v1182 = vadd.f32 %v689, %v1181
  %v1183 = vpop.f32.mrb[0].mxu0
  %1184 = vmatprep.mubr.bf16.mxu0 0
  %1185 = vmatmul.mubr.bf16.gmra.mrb[0].mxu0 %v1142
  %v1186 = vpop.f32.mrb[0].mxu0
  %v1187 = vadd.f32 %v689, %v1186
  %v1188 = vpop.f32.mrb[0].mxu0
  %v1189 = vpop.f32.mrb[0].mxu0
  %v1190 = vpop.f32.mrb[0].mxu0
  %1191 = vdwg.mxu0
  %v1192 = vadd.f32 %v1127, %v1179
  %v1193 = vadd.f32 %v1128, %v1182
  %v1194 = vadd.f32 %v1129, %v1187
  %v1195 = vxor.u32 %v1192, 2147483648
  %v1196 = vxor.u32 %v1193, 2147483648
  %v1197 = vxor.u32 %v1194, 2147483648
  %v1198 = vmul.f32 %v1195, 1.442695
  %v1199 = vpow.pop %v1198
  %v1200 = vmul.f32 %v1196, 1.442695
  %v1201 = vpow.pop %v1200
  %v1202 = vmul.f32 %v1197, 1.442695
  %v1203 = vpow.pop %v1202
  %v1204 = vadd.f32 %v1199, 1.0
  %v1205 = vadd.f32 %v1201, 1.0
  %v1206 = vadd.f32 %v1203, 1.0
  %v1207 = vrcp.pop %v1204
  %v1208 = vmul.f32 1.0, %v1207
  %v1209 = vrcp.pop %v1205
  %v1210 = vmul.f32 1.0, %v1209
  %v1211 = vrcp.pop %v1206
  %v1212 = vmul.f32 1.0, %v1211
  %1216 = vrot.lane.b32.xlu0 %v1179, 64
  %v1217 = vpop.permute.xlu0 %1216
  %1218 = vrot.lane.b32.xlu0 %v1182, 64
  %v1219 = vpop.permute.xlu0 %1218
  %1220 = vrot.lane.b32.xlu0 %v1187, 64
  %v1221 = vpop.permute.xlu0 %1220
  %v1225 = vmul.f32 %v1208, %v1217
  %v1226 = vmul.f32 %v1210, %v1219
  %v1227 = vmul.f32 %v1212, %v1221
  %1231 = vrot.lane.b32.xlu0 %v1225, 64
  %v1232 = vpop.permute.xlu0 %1231
  %1233 = vrot.lane.b32.xlu0 %v1226, 64
  %v1234 = vpop.permute.xlu0 %1233
  %1235 = vrot.lane.b32.xlu0 %v1227, 64
  %v1236 = vpop.permute.xlu0 %1235
  %v1240 = vadd.f32 %v1127, %v1232
  %v1241 = vadd.f32 %v1128, %v1234
  %v1242 = vadd.f32 %v1129, %v1236
  %v1243 = vtanh.pop %v1240
  %v1244 = vtanh.pop %v1241
  %v1245 = vtanh.pop %v1242
  %v1246 = vsub.f32 1.0, %v1208
  %v1247 = vsub.f32 1.0, %v1210
  %v1248 = vsub.f32 1.0, %v1212
  %1252 = vrot.lane.b32.xlu0 %v1243, 96
  %v1253 = vpop.permute.xlu0 %1252
  %1254 = vrot.lane.b32.xlu0 %v1244, 96
  %v1255 = vpop.permute.xlu0 %1254
  %1256 = vrot.lane.b32.xlu0 %v1245, 96
  %v1257 = vpop.permute.xlu0 %1256
  %v1261 = vmul.f32 %v1246, %v1253
  %v1262 = vmul.f32 %v1247, %v1255
  %v1263 = vmul.f32 %v1248, %v1257
  %v1264 = vmul.f32 %v1208, %v1121
  %v1265 = vmul.f32 %v1210, %v1122
  %v1266 = vmul.f32 %v1212, %v1123
  %v1267 = vadd.f32 %v1261, %v1264
  %v1268 = vadd.f32 %v1262, %v1265
  %v1269 = vadd.f32 %v1263, %v1266
  %v1270 = vld [vmem:[%s619] sm:$0xf]
  %v1271 = vld [vmem:[%s619 + $0x4] sm:$0xf]
  %v1272 = vld [vmem:[%s619 + $0x8] sm:$0xf]
  %v1273 = vunpack.c.l.bf16 %v1270
  %v1274 = vunpack.c.l.bf16 %v1271
  %v1275 = vunpack.c.l.bf16 %v1272
  %v1276 = vpack.c.bf16 %v1268, %v1267
  %v1277 = vpack.c.bf16 %v1269, %v1269
  %1280 = vrot.lane.b32.xlu0 %v1276, 96
  %v1281 = vpop.permute.xlu0 %1280
  %1282 = vrot.lane.b32.xlu0 %v1277, 96
  %v1283 = vpop.permute.xlu0 %1282
  %v1285 = vsel %vm148, %v1281, 0
  %v1288 = vsel %vm148, %v1283, 0
  %1290 = vmatprep.subr.bf16.mxu0 0
  %1291 = vmatpush1.bf16.msra.mxu0 %v699
  %1292 = vmatprep.subr.bf16.mxu0 0
  %1293 = vmatpush1.bf16.msra.mxu0 %v700
  %1294 = vmatprep.subr.bf16.mxu0 0
  %1295 = vmatpush1.bf16.msra.mxu0 0
  %1296 = vmatprep.subr.bf16.mxu0 0
  %1297 = vmatpush1.bf16.msra.mxu0 0
  %1298 = vmatprep.subr.bf16.mxu0 0
  %1299 = vmatpush1.bf16.msra.mxu0 0
  %1300 = vmatprep.subr.bf16.mxu0 0
  %1301 = vmatpush1.bf16.msra.mxu0 0
  %1302 = vmatprep.subr.bf16.mxu0 0
  %1303 = vmatpush1.bf16.msra.mxu0 0
  %1304 = vmatprep.subr.bf16.mxu0 0
  %1305 = vmatpush1.bf16.msra.mxu0 0
  %1306 = vmatprep.subr.bf16.mxu0 0
  %1307 = vmatpush1.bf16.msra.mxu0 0
  %1308 = vmatprep.subr.bf16.mxu0 0
  %1309 = vmatpush1.bf16.msra.mxu0 0
  %1310 = vmatprep.subr.bf16.mxu0 0
  %1311 = vmatpush1.bf16.msra.mxu0 0
  %1312 = vmatprep.subr.bf16.mxu0 0
  %1313 = vmatpush1.bf16.msra.mxu0 0
  %1314 = vmatprep.subr.bf16.mxu0 0
  %1315 = vmatpush1.bf16.msra.mxu0 0
  %1316 = vmatprep.subr.bf16.mxu0 0
  %1317 = vmatpush1.bf16.msra.mxu0 0
  %1318 = vmatprep.subr.bf16.mxu0 0
  %1319 = vmatpush1.bf16.msra.mxu0 0
  %1320 = vmatprep.subr.bf16.mxu0 0
  %1321 = vmatpush1.bf16.msra.mxu0 0
  %1322 = vmatprep.mubr.bf16.mxu0 0
  %1323 = vmatmul.mubr.bf16.gmra.mrb[0].mxu0 %v1285
  %v1324 = vpop.f32.mrb[0].mxu0
  %v1325 = vadd.f32 %v689, %v1324
  %v1326 = vpop.f32.mrb[0].mxu0
  %v1327 = vpop.f32.mrb[0].mxu0
  %v1328 = vadd.f32 %v689, %v1327
  %v1329 = vpop.f32.mrb[0].mxu0
  %1330 = vmatprep.mubr.bf16.mxu0 0
  %1331 = vmatmul.mubr.bf16.gmra.mrb[0].mxu0 %v1288
  %v1332 = vpop.f32.mrb[0].mxu0
  %v1333 = vadd.f32 %v689, %v1332
  %v1334 = vpop.f32.mrb[0].mxu0
  %v1335 = vpop.f32.mrb[0].mxu0
  %v1336 = vpop.f32.mrb[0].mxu0
  %1337 = vdwg.mxu0
  %v1338 = vadd.f32 %v1273, %v1325
  %v1339 = vadd.f32 %v1274, %v1328
  %v1340 = vadd.f32 %v1275, %v1333
  %v1341 = vxor.u32 %v1338, 2147483648
  %v1342 = vxor.u32 %v1339, 2147483648
  %v1343 = vxor.u32 %v1340, 2147483648
  %v1344 = vmul.f32 %v1341, 1.442695
  %v1345 = vpow.pop %v1344
  %v1346 = vmul.f32 %v1342, 1.442695
  %v1347 = vpow.pop %v1346
  %v1348 = vmul.f32 %v1343, 1.442695
  %v1349 = vpow.pop %v1348
  %v1350 = vadd.f32 %v1345, 1.0
  %v1351 = vadd.f32 %v1347, 1.0
  %v1352 = vadd.f32 %v1349, 1.0
  %v1353 = vrcp.pop %v1350
  %v1354 = vmul.f32 1.0, %v1353
  %v1355 = vrcp.pop %v1351
  %v1356 = vmul.f32 1.0, %v1355
  %v1357 = vrcp.pop %v1352
  %v1358 = vmul.f32 1.0, %v1357
  %1362 = vrot.lane.b32.xlu0 %v1325, 64
  %v1363 = vpop.permute.xlu0 %1362
  %1364 = vrot.lane.b32.xlu0 %v1328, 64
  %v1365 = vpop.permute.xlu0 %1364
  %1366 = vrot.lane.b32.xlu0 %v1333, 64
  %v1367 = vpop.permute.xlu0 %1366
  %v1371 = vmul.f32 %v1354, %v1363
  %v1372 = vmul.f32 %v1356, %v1365
  %v1373 = vmul.f32 %v1358, %v1367
  %1377 = vrot.lane.b32.xlu0 %v1371, 64
  %v1378 = vpop.permute.xlu0 %1377
  %1379 = vrot.lane.b32.xlu0 %v1372, 64
  %v1380 = vpop.permute.xlu0 %1379
  %1381 = vrot.lane.b32.xlu0 %v1373, 64
  %v1382 = vpop.permute.xlu0 %1381
  %v1386 = vadd.f32 %v1273, %v1378
  %v1387 = vadd.f32 %v1274, %v1380
  %v1388 = vadd.f32 %v1275, %v1382
  %v1389 = vtanh.pop %v1386
  %v1390 = vtanh.pop %v1387
  %v1391 = vtanh.pop %v1388
  %v1392 = vsub.f32 1.0, %v1354
  %v1393 = vsub.f32 1.0, %v1356
  %v1394 = vsub.f32 1.0, %v1358
  %1398 = vrot.lane.b32.xlu0 %v1389, 96
  %v1399 = vpop.permute.xlu0 %1398
  %1400 = vrot.lane.b32.xlu0 %v1390, 96
  %v1401 = vpop.permute.xlu0 %1400
  %1402 = vrot.lane.b32.xlu0 %v1391, 96
  %v1403 = vpop.permute.xlu0 %1402
  %v1407 = vmul.f32 %v1392, %v1399
  %v1408 = vmul.f32 %v1393, %v1401
  %v1409 = vmul.f32 %v1394, %v1403
  %v1410 = vmul.f32 %v1354, %v1267
  %v1411 = vmul.f32 %v1356, %v1268
  %v1412 = vmul.f32 %v1358, %v1269
  %v1413 = vadd.f32 %v1407, %v1410
  %v1414 = vadd.f32 %v1408, %v1411
  %v1415 = vadd.f32 %v1409, %v1412
  %v1416 = vld [vmem:[%s636] sm:$0xf]
  %v1417 = vld [vmem:[%s636 + $0x4] sm:$0xf]
  %v1418 = vld [vmem:[%s636 + $0x8] sm:$0xf]
  %v1419 = vunpack.c.l.bf16 %v1416
  %v1420 = vunpack.c.l.bf16 %v1417
  %v1421 = vunpack.c.l.bf16 %v1418
  %v1422 = vpack.c.bf16 %v1414, %v1413
  %v1423 = vpack.c.bf16 %v1415, %v1415
  %1426 = vrot.lane.b32.xlu0 %v1422, 96
  %v1427 = vpop.permute.xlu0 %1426
  %1428 = vrot.lane.b32.xlu0 %v1423, 96
  %v1429 = vpop.permute.xlu0 %1428
  %v1431 = vsel %vm148, %v1427, 0
  %v1434 = vsel %vm148, %v1429, 0
  %1436 = vmatprep.subr.bf16.mxu0 0
  %1437 = vmatpush1.bf16.msra.mxu0 %v699
  %1438 = vmatprep.subr.bf16.mxu0 0
  %1439 = vmatpush1.bf16.msra.mxu0 %v700
  %1440 = vmatprep.subr.bf16.mxu0 0
  %1441 = vmatpush1.bf16.msra.mxu0 0
  %1442 = vmatprep.subr.bf16.mxu0 0
  %1443 = vmatpush1.bf16.msra.mxu0 0
  %1444 = vmatprep.subr.bf16.mxu0 0
  %1445 = vmatpush1.bf16.msra.mxu0 0
  %1446 = vmatprep.subr.bf16.mxu0 0
  %1447 = vmatpush1.bf16.msra.mxu0 0
  %1448 = vmatprep.subr.bf16.mxu0 0
  %1449 = vmatpush1.bf16.msra.mxu0 0
  %1450 = vmatprep.subr.bf16.mxu0 0
  %1451 = vmatpush1.bf16.msra.mxu0 0
  %1452 = vmatprep.subr.bf16.mxu0 0
  %1453 = vmatpush1.bf16.msra.mxu0 0
  %1454 = vmatprep.subr.bf16.mxu0 0
  %1455 = vmatpush1.bf16.msra.mxu0 0
  %1456 = vmatprep.subr.bf16.mxu0 0
  %1457 = vmatpush1.bf16.msra.mxu0 0
  %1458 = vmatprep.subr.bf16.mxu0 0
  %1459 = vmatpush1.bf16.msra.mxu0 0
  %1460 = vmatprep.subr.bf16.mxu0 0
  %1461 = vmatpush1.bf16.msra.mxu0 0
  %1462 = vmatprep.subr.bf16.mxu0 0
  %1463 = vmatpush1.bf16.msra.mxu0 0
  %1464 = vmatprep.subr.bf16.mxu0 0
  %1465 = vmatpush1.bf16.msra.mxu0 0
  %1466 = vmatprep.subr.bf16.mxu0 0
  %1467 = vmatpush1.bf16.msra.mxu0 0
  %1468 = vmatprep.mubr.bf16.mxu0 0
  %1469 = vmatmul.mubr.bf16.gmra.mrb[0].mxu0 %v1431
  %v1470 = vpop.f32.mrb[0].mxu0
  %v1471 = vadd.f32 %v689, %v1470
  %v1472 = vpop.f32.mrb[0].mxu0
  %v1473 = vpop.f32.mrb[0].mxu0
  %v1474 = vadd.f32 %v689, %v1473
  %v1475 = vpop.f32.mrb[0].mxu0
  %1476 = vmatprep.mubr.bf16.mxu0 0
  %1477 = vmatmul.mubr.bf16.gmra.mrb[0].mxu0 %v1434
  %v1478 = vpop.f32.mrb[0].mxu0
  %v1479 = vadd.f32 %v689, %v1478
  %v1480 = vpop.f32.mrb[0].mxu0
  %v1481 = vpop.f32.mrb[0].mxu0
  %v1482 = vpop.f32.mrb[0].mxu0
  %1483 = vdwg.mxu0
  %v1484 = vadd.f32 %v1419, %v1471
  %v1485 = vadd.f32 %v1420, %v1474
  %v1486 = vadd.f32 %v1421, %v1479
  %v1487 = vxor.u32 %v1484, 2147483648
  %v1488 = vxor.u32 %v1485, 2147483648
  %v1489 = vxor.u32 %v1486, 2147483648
  %v1490 = vmul.f32 %v1487, 1.442695
  %v1491 = vpow.pop %v1490
  %v1492 = vmul.f32 %v1488, 1.442695
  %v1493 = vpow.pop %v1492
  %v1494 = vmul.f32 %v1489, 1.442695
  %v1495 = vpow.pop %v1494
  %v1496 = vadd.f32 %v1491, 1.0
  %v1497 = vadd.f32 %v1493, 1.0
  %v1498 = vadd.f32 %v1495, 1.0
  %v1499 = vrcp.pop %v1496
  %v1500 = vmul.f32 1.0, %v1499
  %v1501 = vrcp.pop %v1497
  %v1502 = vmul.f32 1.0, %v1501
  %v1503 = vrcp.pop %v1498
  %v1504 = vmul.f32 1.0, %v1503
  %1508 = vrot.lane.b32.xlu0 %v1471, 64
  %v1509 = vpop.permute.xlu0 %1508
  %1510 = vrot.lane.b32.xlu0 %v1474, 64
  %v1511 = vpop.permute.xlu0 %1510
  %1512 = vrot.lane.b32.xlu0 %v1479, 64
  %v1513 = vpop.permute.xlu0 %1512
  %v1517 = vmul.f32 %v1500, %v1509
  %v1518 = vmul.f32 %v1502, %v1511
  %v1519 = vmul.f32 %v1504, %v1513
  %1523 = vrot.lane.b32.xlu0 %v1517, 64
  %v1524 = vpop.permute.xlu0 %1523
  %1525 = vrot.lane.b32.xlu0 %v1518, 64
  %v1526 = vpop.permute.xlu0 %1525
  %1527 = vrot.lane.b32.xlu0 %v1519, 64
  %v1528 = vpop.permute.xlu0 %1527
  %v1532 = vadd.f32 %v1419, %v1524
  %v1533 = vadd.f32 %v1420, %v1526
  %v1534 = vadd.f32 %v1421, %v1528
  %v1535 = vtanh.pop %v1532
  %v1536 = vtanh.pop %v1533
  %v1537 = vtanh.pop %v1534
  %v1538 = vsub.f32 1.0, %v1500
  %v1539 = vsub.f32 1.0, %v1502
  %v1540 = vsub.f32 1.0, %v1504
  %1544 = vrot.lane.b32.xlu0 %v1535, 96
  %v1545 = vpop.permute.xlu0 %1544
  %1546 = vrot.lane.b32.xlu0 %v1536, 96
  %v1547 = vpop.permute.xlu0 %1546
  %1548 = vrot.lane.b32.xlu0 %v1537, 96
  %v1549 = vpop.permute.xlu0 %1548
  %v1553 = vmul.f32 %v1538, %v1545
  %v1554 = vmul.f32 %v1539, %v1547
  %v1555 = vmul.f32 %v1540, %v1549
  %v1556 = vmul.f32 %v1500, %v1413
  %v1557 = vmul.f32 %v1502, %v1414
  %v1558 = vmul.f32 %v1504, %v1415
  %v1559 = vadd.f32 %v1553, %v1556
  %v1560 = vadd.f32 %v1554, %v1557
  %v1561 = vadd.f32 %v1555, %v1558
  %v1562 = vld [vmem:[%s653] sm:$0xf]
  %v1563 = vld [vmem:[%s653 + $0x4] sm:$0xf]
  %v1564 = vld [vmem:[%s653 + $0x8] sm:$0xf]
  %v1565 = vunpack.c.l.bf16 %v1562
  %v1566 = vunpack.c.l.bf16 %v1563
  %v1567 = vunpack.c.l.bf16 %v1564
  %v1568 = vpack.c.bf16 %v1560, %v1559
  %v1569 = vpack.c.bf16 %v1561, %v1561
  %1572 = vrot.lane.b32.xlu0 %v1568, 96
  %v1573 = vpop.permute.xlu0 %1572
  %1574 = vrot.lane.b32.xlu0 %v1569, 96
  %v1575 = vpop.permute.xlu0 %1574
  %v1577 = vsel %vm148, %v1573, 0
  %v1580 = vsel %vm148, %v1575, 0
  %1582 = vmatprep.subr.bf16.mxu0 0
  %1583 = vmatpush1.bf16.msra.mxu0 %v699
  %1584 = vmatprep.subr.bf16.mxu0 0
  %1585 = vmatpush1.bf16.msra.mxu0 %v700
  %1586 = vmatprep.subr.bf16.mxu0 0
  %1587 = vmatpush1.bf16.msra.mxu0 0
  %1588 = vmatprep.subr.bf16.mxu0 0
  %1589 = vmatpush1.bf16.msra.mxu0 0
  %1590 = vmatprep.subr.bf16.mxu0 0
  %1591 = vmatpush1.bf16.msra.mxu0 0
  %1592 = vmatprep.subr.bf16.mxu0 0
  %1593 = vmatpush1.bf16.msra.mxu0 0
  %1594 = vmatprep.subr.bf16.mxu0 0
  %1595 = vmatpush1.bf16.msra.mxu0 0
  %1596 = vmatprep.subr.bf16.mxu0 0
  %1597 = vmatpush1.bf16.msra.mxu0 0
  %1598 = vmatprep.subr.bf16.mxu0 0
  %1599 = vmatpush1.bf16.msra.mxu0 0
  %1600 = vmatprep.subr.bf16.mxu0 0
  %1601 = vmatpush1.bf16.msra.mxu0 0
  %1602 = vmatprep.subr.bf16.mxu0 0
  %1603 = vmatpush1.bf16.msra.mxu0 0
  %1604 = vmatprep.subr.bf16.mxu0 0
  %1605 = vmatpush1.bf16.msra.mxu0 0
  %1606 = vmatprep.subr.bf16.mxu0 0
  %1607 = vmatpush1.bf16.msra.mxu0 0
  %1608 = vmatprep.subr.bf16.mxu0 0
  %1609 = vmatpush1.bf16.msra.mxu0 0
  %1610 = vmatprep.subr.bf16.mxu0 0
  %1611 = vmatpush1.bf16.msra.mxu0 0
  %1612 = vmatprep.subr.bf16.mxu0 0
  %1613 = vmatpush1.bf16.msra.mxu0 0
  %1614 = vmatprep.mubr.bf16.mxu0 0
  %1615 = vmatmul.mubr.bf16.gmra.mrb[0].mxu0 %v1577
  %v1616 = vpop.f32.mrb[0].mxu0
  %v1617 = vadd.f32 %v689, %v1616
  %v1618 = vpop.f32.mrb[0].mxu0
  %v1619 = vpop.f32.mrb[0].mxu0
  %v1620 = vadd.f32 %v689, %v1619
  %v1621 = vpop.f32.mrb[0].mxu0
  %1622 = vmatprep.mubr.bf16.mxu0 0
  %1623 = vmatmul.mubr.bf16.gmra.mrb[0].mxu0 %v1580
  %v1624 = vpop.f32.mrb[0].mxu0
  %v1625 = vadd.f32 %v689, %v1624
  %v1626 = vpop.f32.mrb[0].mxu0
  %v1627 = vpop.f32.mrb[0].mxu0
  %v1628 = vpop.f32.mrb[0].mxu0
  %1629 = vdwg.mxu0
  %v1630 = vadd.f32 %v1565, %v1617
  %v1631 = vadd.f32 %v1566, %v1620
  %v1632 = vadd.f32 %v1567, %v1625
  %v1633 = vxor.u32 %v1630, 2147483648
  %v1634 = vxor.u32 %v1631, 2147483648
  %v1635 = vxor.u32 %v1632, 2147483648
  %v1636 = vmul.f32 %v1633, 1.442695
  %v1637 = vpow.pop %v1636
  %v1638 = vmul.f32 %v1634, 1.442695
  %v1639 = vpow.pop %v1638
  %v1640 = vmul.f32 %v1635, 1.442695
  %v1641 = vpow.pop %v1640
  %v1642 = vadd.f32 %v1637, 1.0
  %v1643 = vadd.f32 %v1639, 1.0
  %v1644 = vadd.f32 %v1641, 1.0
  %v1645 = vrcp.pop %v1642
  %v1646 = vmul.f32 1.0, %v1645
  %v1647 = vrcp.pop %v1643
  %v1648 = vmul.f32 1.0, %v1647
  %v1649 = vrcp.pop %v1644
  %v1650 = vmul.f32 1.0, %v1649
  %1654 = vrot.lane.b32.xlu0 %v1617, 64
  %v1655 = vpop.permute.xlu0 %1654
  %1656 = vrot.lane.b32.xlu0 %v1620, 64
  %v1657 = vpop.permute.xlu0 %1656
  %1658 = vrot.lane.b32.xlu0 %v1625, 64
  %v1659 = vpop.permute.xlu0 %1658
  %v1663 = vmul.f32 %v1646, %v1655
  %v1664 = vmul.f32 %v1648, %v1657
  %v1665 = vmul.f32 %v1650, %v1659
  %1669 = vrot.lane.b32.xlu0 %v1663, 64
  %v1670 = vpop.permute.xlu0 %1669
  %1671 = vrot.lane.b32.xlu0 %v1664, 64
  %v1672 = vpop.permute.xlu0 %1671
  %1673 = vrot.lane.b32.xlu0 %v1665, 64
  %v1674 = vpop.permute.xlu0 %1673
  %v1678 = vadd.f32 %v1565, %v1670
  %v1679 = vadd.f32 %v1566, %v1672
  %v1680 = vadd.f32 %v1567, %v1674
  %v1681 = vtanh.pop %v1678
  %v1682 = vtanh.pop %v1679
  %v1683 = vtanh.pop %v1680
  %v1684 = vsub.f32 1.0, %v1646
  %v1685 = vsub.f32 1.0, %v1648
  %v1686 = vsub.f32 1.0, %v1650
  %1690 = vrot.lane.b32.xlu0 %v1681, 96
  %v1691 = vpop.permute.xlu0 %1690
  %1692 = vrot.lane.b32.xlu0 %v1682, 96
  %v1693 = vpop.permute.xlu0 %1692
  %1694 = vrot.lane.b32.xlu0 %v1683, 96
  %v1695 = vpop.permute.xlu0 %1694
  %v1699 = vmul.f32 %v1684, %v1691
  %v1700 = vmul.f32 %v1685, %v1693
  %v1701 = vmul.f32 %v1686, %v1695
  %v1702 = vmul.f32 %v1646, %v1559
  %v1703 = vmul.f32 %v1648, %v1560
  %v1704 = vmul.f32 %v1650, %v1561
  %v1705 = vadd.f32 %v1699, %v1702
  %v1706 = vadd.f32 %v1700, %v1703
  %v1707 = vadd.f32 %v1701, %v1704
  %v1708 = vld [vmem:[%s670] sm:$0xf]
  %v1709 = vld [vmem:[%s670 + $0x4] sm:$0xf]
  %v1710 = vld [vmem:[%s670 + $0x8] sm:$0xf]
  %v1711 = vunpack.c.l.bf16 %v1708
  %v1712 = vunpack.c.l.bf16 %v1709
  %v1713 = vunpack.c.l.bf16 %v1710
  %v1714 = vpack.c.bf16 %v1706, %v1705
  %v1715 = vpack.c.bf16 %v1707, %v1707
  %1718 = vrot.lane.b32.xlu0 %v1714, 96
  %v1719 = vpop.permute.xlu0 %1718
  %1720 = vrot.lane.b32.xlu0 %v1715, 96
  %v1721 = vpop.permute.xlu0 %1720
  %v1723 = vsel %vm148, %v1719, 0
  %v1726 = vsel %vm148, %v1721, 0
  %1728 = vmatprep.subr.bf16.mxu0 0
  %1729 = vmatpush1.bf16.msra.mxu0 %v699
  %1730 = vmatprep.subr.bf16.mxu0 0
  %1731 = vmatpush1.bf16.msra.mxu0 %v700
  %1732 = vmatprep.subr.bf16.mxu0 0
  %1733 = vmatpush1.bf16.msra.mxu0 0
  %1734 = vmatprep.subr.bf16.mxu0 0
  %1735 = vmatpush1.bf16.msra.mxu0 0
  %1736 = vmatprep.subr.bf16.mxu0 0
  %1737 = vmatpush1.bf16.msra.mxu0 0
  %1738 = vmatprep.subr.bf16.mxu0 0
  %1739 = vmatpush1.bf16.msra.mxu0 0
  %1740 = vmatprep.subr.bf16.mxu0 0
  %1741 = vmatpush1.bf16.msra.mxu0 0
  %1742 = vmatprep.subr.bf16.mxu0 0
  %1743 = vmatpush1.bf16.msra.mxu0 0
  %1744 = vmatprep.subr.bf16.mxu0 0
  %1745 = vmatpush1.bf16.msra.mxu0 0
  %1746 = vmatprep.subr.bf16.mxu0 0
  %1747 = vmatpush1.bf16.msra.mxu0 0
  %1748 = vmatprep.subr.bf16.mxu0 0
  %1749 = vmatpush1.bf16.msra.mxu0 0
  %1750 = vmatprep.subr.bf16.mxu0 0
  %1751 = vmatpush1.bf16.msra.mxu0 0
  %1752 = vmatprep.subr.bf16.mxu0 0
  %1753 = vmatpush1.bf16.msra.mxu0 0
  %1754 = vmatprep.subr.bf16.mxu0 0
  %1755 = vmatpush1.bf16.msra.mxu0 0
  %1756 = vmatprep.subr.bf16.mxu0 0
  %1757 = vmatpush1.bf16.msra.mxu0 0
  %1758 = vmatprep.subr.bf16.mxu0 0
  %1759 = vmatpush1.bf16.msra.mxu0 0
  %1760 = vmatprep.mubr.bf16.mxu0 0
  %1761 = vmatmul.mubr.bf16.gmra.mrb[0].mxu0 %v1723
  %v1762 = vpop.f32.mrb[0].mxu0
  %v1763 = vadd.f32 %v689, %v1762
  %v1764 = vpop.f32.mrb[0].mxu0
  %v1765 = vpop.f32.mrb[0].mxu0
  %v1766 = vadd.f32 %v689, %v1765
  %v1767 = vpop.f32.mrb[0].mxu0
  %1768 = vmatprep.mubr.bf16.mxu0 0
  %1769 = vmatmul.mubr.bf16.gmra.mrb[0].mxu0 %v1726
  %v1770 = vpop.f32.mrb[0].mxu0
  %v1771 = vadd.f32 %v689, %v1770
  %v1772 = vpop.f32.mrb[0].mxu0
  %v1773 = vpop.f32.mrb[0].mxu0
  %v1774 = vpop.f32.mrb[0].mxu0
  %1775 = vdwg.mxu0
  %v1776 = vadd.f32 %v1711, %v1763
  %v1777 = vadd.f32 %v1712, %v1766
  %v1778 = vadd.f32 %v1713, %v1771
  %v1779 = vxor.u32 %v1776, 2147483648
  %v1780 = vxor.u32 %v1777, 2147483648
  %v1781 = vxor.u32 %v1778, 2147483648
  %v1782 = vmul.f32 %v1779, 1.442695
  %v1783 = vpow.pop %v1782
  %v1784 = vmul.f32 %v1780, 1.442695
  %v1785 = vpow.pop %v1784
  %v1786 = vmul.f32 %v1781, 1.442695
  %v1787 = vpow.pop %v1786
  %v1788 = vadd.f32 %v1783, 1.0
  %v1789 = vadd.f32 %v1785, 1.0
  %v1790 = vadd.f32 %v1787, 1.0
  %v1791 = vrcp.pop %v1788
  %v1792 = vmul.f32 1.0, %v1791
  %v1793 = vrcp.pop %v1789
  %v1794 = vmul.f32 1.0, %v1793
  %v1795 = vrcp.pop %v1790
  %v1796 = vmul.f32 1.0, %v1795
  %1800 = vrot.lane.b32.xlu0 %v1763, 64
  %v1801 = vpop.permute.xlu0 %1800
  %1802 = vrot.lane.b32.xlu0 %v1766, 64
  %v1803 = vpop.permute.xlu0 %1802
  %1804 = vrot.lane.b32.xlu0 %v1771, 64
  %v1805 = vpop.permute.xlu0 %1804
  %v1809 = vmul.f32 %v1792, %v1801
  %v1810 = vmul.f32 %v1794, %v1803
  %v1811 = vmul.f32 %v1796, %v1805
  %1815 = vrot.lane.b32.xlu0 %v1809, 64
  %v1816 = vpop.permute.xlu0 %1815
  %1817 = vrot.lane.b32.xlu0 %v1810, 64
  %v1818 = vpop.permute.xlu0 %1817
  %1819 = vrot.lane.b32.xlu0 %v1811, 64
  %v1820 = vpop.permute.xlu0 %1819
  %v1824 = vadd.f32 %v1711, %v1816
  %v1825 = vadd.f32 %v1712, %v1818
  %v1826 = vadd.f32 %v1713, %v1820
  %v1827 = vtanh.pop %v1824
  %v1828 = vtanh.pop %v1825
  %v1829 = vtanh.pop %v1826
  %v1830 = vsub.f32 1.0, %v1792
  %v1831 = vsub.f32 1.0, %v1794
  %v1832 = vsub.f32 1.0, %v1796
  %1836 = vrot.lane.b32.xlu0 %v1827, 96
  %v1837 = vpop.permute.xlu0 %1836
  %1838 = vrot.lane.b32.xlu0 %v1828, 96
  %v1839 = vpop.permute.xlu0 %1838
  %1840 = vrot.lane.b32.xlu0 %v1829, 96
  %v1841 = vpop.permute.xlu0 %1840
  %v1845 = vmul.f32 %v1830, %v1837
  %v1846 = vmul.f32 %v1831, %v1839
  %v1847 = vmul.f32 %v1832, %v1841
  %v1848 = vmul.f32 %v1792, %v1705
  %v1849 = vmul.f32 %v1794, %v1706
  %v1850 = vmul.f32 %v1796, %v1707
  %v1851 = vadd.f32 %v1845, %v1848
  %v1852 = vadd.f32 %v1846, %v1849
  %v1853 = vadd.f32 %v1847, %v1850
  %v1854 = vpack.c.bf16 %v1852, %v1851
  %v1855 = vpack.c.bf16 %v1853, %v1853
  %v1856 = vld [vmem:[%s7] sm:$0xf]
  %v1857 = vld [vmem:[%s7 + $0x4] sm:$0xf]
  %v1858 = vld [vmem:[%s7 + $0x8] sm:$0xf]
  %v1859 = vld [vmem:[%s7 + $0xc] sm:$0xf]
  %v1860 = vld [vmem:[%s8] sm:$0x1]
  %v1862 = vlaneseq
  %v1863 = vshrl.u32 %v1862, 7
  %v1864 = vsub.s32 0, %v1863
  %v1865 = vrot.slane %v1860, %v1864
  %1869 = vrot.lane.b32.xlu0 %v1854, 96
  %v1870 = vpop.permute.xlu0 %1869
  %1871 = vrot.lane.b32.xlu0 %v1855, 96
  %v1872 = vpop.permute.xlu0 %1871
  %v1877 = vunpack.c.l.b16 %v1856
  %v1878 = vunpack.c.l.b16 %v1857
  %v1879 = vunpack.c.l.b16 %v1858
  %v1880 = vunpack.c.l.b16 %v1859
  %v1881 = vpack.c.b16 %v1878, %v1877
  %v1882 = vpack.c.b16 %v1880, %v1879
  %v1886 = vsel %vm148, %v1870, 0
  %v1889 = vsel %vm148, %v1872, 0
  %1891 = vmatprep.subr.bf16.mxu0 0
  %1892 = vmatpush1.bf16.msra.mxu0 %v1881
  %1893 = vmatprep.subr.bf16.mxu0 0
  %1894 = vmatpush1.bf16.msra.mxu0 %v1882
  %1895 = vmatprep.subr.bf16.mxu0 0
  %1896 = vmatpush1.bf16.msra.mxu0 0
  %1897 = vmatprep.subr.bf16.mxu0 0
  %1898 = vmatpush1.bf16.msra.mxu0 0
  %1899 = vmatprep.subr.bf16.mxu0 0
  %1900 = vmatpush1.bf16.msra.mxu0 0
  %1901 = vmatprep.subr.bf16.mxu0 0
  %1902 = vmatpush1.bf16.msra.mxu0 0
  %1903 = vmatprep.subr.bf16.mxu0 0
  %1904 = vmatpush1.bf16.msra.mxu0 0
  %1905 = vmatprep.subr.bf16.mxu0 0
  %1906 = vmatpush1.bf16.msra.mxu0 0
  %1907 = vmatprep.subr.bf16.mxu0 0
  %1908 = vmatpush1.bf16.msra.mxu0 0
  %1909 = vmatprep.subr.bf16.mxu0 0
  %1910 = vmatpush1.bf16.msra.mxu0 0
  %1911 = vmatprep.subr.bf16.mxu0 0
  %1912 = vmatpush1.bf16.msra.mxu0 0
  %1913 = vmatprep.subr.bf16.mxu0 0
  %1914 = vmatpush1.bf16.msra.mxu0 0
  %1915 = vmatprep.subr.bf16.mxu0 0
  %1916 = vmatpush1.bf16.msra.mxu0 0
  %1917 = vmatprep.subr.bf16.mxu0 0
  %1918 = vmatpush1.bf16.msra.mxu0 0
  %1919 = vmatprep.subr.bf16.mxu0 0
  %1920 = vmatpush1.bf16.msra.mxu0 0
  %1921 = vmatprep.subr.bf16.mxu0 0
  %1922 = vmatpush1.bf16.msra.mxu0 0
  %1923 = vmatprep.mubr.bf16.mxu0 0
  %1924 = vmatmul.mubr.bf16.gmra.mrb[0].mxu0 %v1886
  %v1925 = vpop.f32.mrb[0].mxu0
  %v1926 = vadd.f32 %v1865, %v1925
  %v1927 = vpop.f32.mrb[0].mxu0
  %v1928 = vpop.f32.mrb[0].mxu0
  %v1929 = vadd.f32 %v1865, %v1928
  %v1930 = vpop.f32.mrb[0].mxu0
  %1931 = vmatprep.mubr.bf16.mxu0 0
  %1932 = vmatmul.mubr.bf16.gmra.mrb[0].mxu0 %v1889
  %v1933 = vpop.f32.mrb[0].mxu0
  %v1934 = vadd.f32 %v1865, %v1933
  %v1935 = vpop.f32.mrb[0].mxu0
  %v1936 = vpop.f32.mrb[0].mxu0
  %v1937 = vpop.f32.mrb[0].mxu0
  %1938 = vdwg.mxu0
  %1939 = vst [vmem:[%s11] sm:$0xff] %v1926
  %1940 = vst [vmem:[%s11 + $0x8] sm:$0xff] %v1929
  %1941 = vst [vmem:[%s11 + $0x10] sm:$0xff] %v1934
  %v1942 = vmax.f32 %v1926, %v1929
  %v1943 = vmax.f32 %v1942, %v1934
  %v1944 = vmul.f32 %v1943, %v1943
  %1945 = vadd.xlane.f32.xlu0 %v1944
  %v1946 = vpop.xlane.xlu0 %1945
  %v1947 = vmax.f32 %v1946, 1e-24
  %v1948 = vrsqrt.pop %v1947
  %v1949 = vmul.f32 %v1943, %v1948
  %v1950 = vpack.c.bf16 %v1949, %v1949
  %v1951 = vld [vmem:[%s9] sm:$0xf]
  %v1952 = vld [vmem:[%s9 + $0x4] sm:$0xf]
  %v1953 = vld [vmem:[%s9 + $0x8] sm:$0xf]
  %v1954 = vld [vmem:[%s9 + $0xc] sm:$0xf]
  %v1955 = vld [vmem:[%s9 + $0x10] sm:$0xf]
  %v1956 = vld [vmem:[%s9 + $0x14] sm:$0xf]
  %v1957 = vld [vmem:[%s9 + $0x18] sm:$0xf]
  %v1958 = vld [vmem:[%s9 + $0x1c] sm:$0xf]
  %v1959 = vld [vmem:[%s9 + $0x20] sm:$0xf]
  %v1960 = vld [vmem:[%s9 + $0x24] sm:$0xf]
  %v1961 = vld [vmem:[%s9 + $0x28] sm:$0xf]
  %v1962 = vld [vmem:[%s9 + $0x2c] sm:$0xf]
  %v1963 = vld [vmem:[%s9 + $0x30] sm:$0xf]
  %v1964 = vld [vmem:[%s9 + $0x34] sm:$0xf]
  %v1965 = vld [vmem:[%s9 + $0x38] sm:$0xf]
  %v1966 = vld [vmem:[%s9 + $0x3c] sm:$0xf]
  %v1967 = vld [vmem:[%s10] sm:$0x1]
  %v1969 = vlaneseq
  %v1970 = vshrl.u32 %v1969, 7
  %v1971 = vsub.s32 0, %v1970
  %v1972 = vrot.slane %v1967, %v1971
  %v1990 = vunpack.c.l.b16 %v1951
  %v1991 = vunpack.c.l.b16 %v1952
  %v1992 = vunpack.c.l.b16 %v1953
  %v1993 = vunpack.c.l.b16 %v1954
  %v1994 = vunpack.c.l.b16 %v1955
  %v1995 = vunpack.c.l.b16 %v1956
  %v1996 = vunpack.c.l.b16 %v1957
  %v1997 = vunpack.c.l.b16 %v1958
  %v1998 = vunpack.c.l.b16 %v1959
  %v1999 = vunpack.c.l.b16 %v1960
  %v2000 = vunpack.c.l.b16 %v1961
  %v2001 = vunpack.c.l.b16 %v1962
  %v2002 = vunpack.c.l.b16 %v1963
  %v2003 = vunpack.c.l.b16 %v1964
  %v2004 = vunpack.c.l.b16 %v1965
  %v2005 = vunpack.c.l.b16 %v1966
  %v2006 = vpack.c.b16 %v1991, %v1990
  %v2007 = vpack.c.b16 %v1993, %v1992
  %v2008 = vpack.c.b16 %v1995, %v1994
  %v2009 = vpack.c.b16 %v1997, %v1996
  %v2010 = vpack.c.b16 %v1999, %v1998
  %v2011 = vpack.c.b16 %v2001, %v2000
  %v2012 = vpack.c.b16 %v2003, %v2002
  %v2013 = vpack.c.b16 %v2005, %v2004
  %2022 = vmatprep.subr.bf16.mxu0 0
  %2023 = vmatpush1.bf16.msra.mxu0 %v2006
  %2024 = vmatprep.subr.bf16.mxu0 0
  %2025 = vmatpush1.bf16.msra.mxu0 %v2007
  %2026 = vmatprep.subr.bf16.mxu0 0
  %2027 = vmatpush1.bf16.msra.mxu0 %v2008
  %2028 = vmatprep.subr.bf16.mxu0 0
  %2029 = vmatpush1.bf16.msra.mxu0 %v2009
  %2030 = vmatprep.subr.bf16.mxu0 0
  %2031 = vmatpush1.bf16.msra.mxu0 %v2010
  %2032 = vmatprep.subr.bf16.mxu0 0
  %2033 = vmatpush1.bf16.msra.mxu0 %v2011
  %2034 = vmatprep.subr.bf16.mxu0 0
  %2035 = vmatpush1.bf16.msra.mxu0 %v2012
  %2036 = vmatprep.subr.bf16.mxu0 0
  %2037 = vmatpush1.bf16.msra.mxu0 %v2013
  %2038 = vmatprep.subr.bf16.mxu0 0
  %2039 = vmatpush1.bf16.msra.mxu0 0
  %2040 = vmatprep.subr.bf16.mxu0 0
  %2041 = vmatpush1.bf16.msra.mxu0 0
  %2042 = vmatprep.subr.bf16.mxu0 0
  %2043 = vmatpush1.bf16.msra.mxu0 0
  %2044 = vmatprep.subr.bf16.mxu0 0
  %2045 = vmatpush1.bf16.msra.mxu0 0
  %2046 = vmatprep.subr.bf16.mxu0 0
  %2047 = vmatpush1.bf16.msra.mxu0 0
  %2048 = vmatprep.subr.bf16.mxu0 0
  %2049 = vmatpush1.bf16.msra.mxu0 0
  %2050 = vmatprep.subr.bf16.mxu0 0
  %2051 = vmatpush1.bf16.msra.mxu0 0
  %2052 = vmatprep.subr.bf16.mxu0 0
  %2053 = vmatpush1.bf16.msra.mxu0 0
  %2054 = vmatprep.mubr.bf16.mxu0 0
  %2055 = vmatmul.mubr.bf16.gmra.mrb[0].mxu0 %v1950
  %v2056 = vpop.f32.mrb[0].mxu0
  %v2057 = vadd.f32 %v1972, %v2056
  %v2058 = vpop.f32.mrb[0].mxu0
  %v2059 = vpop.f32.mrb[0].mxu0
  %v2060 = vpop.f32.mrb[0].mxu0
  %2061 = vdwg.mxu0
  %2062 = vst [vmem:[%s12] sm:$0xff] %v2057
  // Predicated region
  $region46: #{client_max_forward.1} parent=0 // pred_check
    _
  $region47: #{client_max_forward.1} parent=0 // pred_check_branch
    %2064 = sbr.rel (0) target = $region49
  $region48: #{client_max_forward.1} parent=0 // pred_region
    _
  $region49: #{client_max_forward.1} parent=0 // pred_fallthru
    _
  // Predicated region
  $region50: #{client_max_forward.1} parent=0 // pred_check
    _
  $region51: #{client_max_forward.1} parent=0 // pred_check_branch
    %2066 = sbr.rel (0) target = $region53
  $region52: #{client_max_forward.1} parent=0 // pred_region
    _
  $region53: #{client_max_forward.1} parent=0 // pred_fallthru
    _
  // Predicated region
  $region54: #{client_max_forward.1} parent=0 // pred_check
    _
  $region55: #{client_max_forward.1} parent=0 // pred_check_branch
    %2068 = sbr.rel (0) target = $region57
  $region56: #{client_max_forward.1} parent=0 // pred_region
    _
  $region57: #{client_max_forward.1} parent=0 // pred_fallthru
    _
  // Predicated region
  $region58: #{client_max_forward.1} parent=0 // pred_check
    _
  $region59: #{client_max_forward.1} parent=0 // pred_check_branch
    %2070 = sbr.rel (0) target = $region61
  $region60: #{client_max_forward.1} parent=0 // pred_region
    _
  $region61: #{client_max_forward.1} parent=0 // pred_fallthru
    _

</llo_original>
